<compile_context>
chip_gen: v5e
topology: v5e:2x2
jax: 0.10.0
libtpu: 0.0.40
codegen_flags: <defaults>
</compile_context>

<pallas_src>
import math
import functools

import jax
import jax.numpy as jnp
from jax.experimental import pallas as pl
from jax.experimental.pallas import tpu as pltpu

# Model configuration (consistent with the module's __init__, 'Helpdesk').
HIDDEN = 32                      # hidden_dim
OUT_SIZE = 5                     # out_size
BATCH = 2                        # batch_size
SEQ = 8                          # sequence length
ACT_VOCAB = 10                   # len(col_name_index_dict['ActivityID'])
ACT_EMB = 10                     # Helpdesk activity embedding dim
MIN_MAX = (0, 1)                 # numeric time-stamp columns
EMB_DIM = len(MIN_MAX) + ACT_EMB  # embedding_dim fed to the QRNN (= 12)

# In-kernel encoder-row layout: [t0, t1 | one-hot(ACT_VOCAB) | 1 | zero pad]
BIAS_LANE = len(MIN_MAX) + ACT_VOCAB   # = 12
ENC_LANES = 16                         # padded width (>= BIAS_LANE + 1)

# Packed parameter buffer layout (rows; all sections start 8-aligned).
#   rows 0:BIAS_LANE      : folded gate weights  (cols [f_f|f_b|o_f|o_b|z_f|z_b])
#   row  BIAS_LANE        : fused gate bias row
#   row  ROW_MU           : weight_Mu^T               (cols 0:2H)
#   rows ROW_WO:ROW_WO+2H : output linear weight      (cols 0:OUT)
#   row  ROW_BO           : output linear bias        (cols 0:OUT)
ROW_MU = 16
ROW_WO = 24
ROW_BO = ROW_WO + 2 * HIDDEN      # = 88
PW_ROWS = 96                      # padded to a multiple of 8
PW_COLS = 6 * HIDDEN              # = 192


def qrnn7_kernel(xt_ref, pw_ref, out_ref,
                 f_fwd, f_bwd, o_fwd, o_bwd, fz_fwd, fz_bwd, h_fwd, h_bwd,
                 *, B, S, H, OUT):
    """Fused forward pass.

    xt_ref : (B*S, 3)       raw rows [time0, time1, activity_id], batch-major (b, t)
    pw_ref : (PW_ROWS, 6H)  packed parameters (see layout above)
    out_ref: (B, OUT)
    scratch: 8 x VMEM (B*S, H) f32 buffers (per-direction gates + hidden rows)
    """
    BS = B * S

    # ---- rebuild the encoder row in-kernel (replaces gather/concat XLA glue) ----
    lane = jax.lax.broadcasted_iota(jnp.int32, (BS, ENC_LANES), 1)
    ids = xt_ref[:, 2:3].astype(jnp.int32)            # activity id per row
    t0 = xt_ref[:, 0:1]
    t1 = xt_ref[:, 1:2]
    enc = (jnp.where(lane == 0, t0, 0.0)
           + jnp.where(lane == 1, t1, 0.0)
           + (lane == ids + len(MIN_MAX)).astype(jnp.float32)   # one-hot, lanes 2:12
           + (lane == BIAS_LANE).astype(jnp.float32))           # ones lane (bias)

    # ---- single fused gate projection, bias folded into the weight block ----
    g = jnp.dot(enc, pw_ref[0:ENC_LANES, :],
                preferred_element_type=jnp.float32)             # (BS, 6H)

    # cols [f_f|f_b | o_f|o_b | z_f|z_b]: sigmoid slice lane-aligned at 0:4H.
    fo = 1.0 / (1.0 + jnp.exp(-g[:, 0:4 * H]))       # exact sigmoid (gates compound)
    z = jnp.tanh(g[:, 4 * H:6 * H])                  # (BS, 2H)
    f = fo[:, 0:2 * H]                               # (BS, 2H) [fwd|bwd]
    o = fo[:, 2 * H:4 * H]                           # (BS, 2H)
    fz = (1.0 - f) * z                               # pre-folded (1-f)*z

    # ---- spill activated gates to per-direction VMEM scratch (one slab store
    #      each) so the serial loop uses row vld's instead of XLU extracts. ----
    f_fwd[...] = f[:, 0:H];     f_bwd[...] = f[:, H:2 * H]
    o_fwd[...] = o[:, 0:H];     o_bwd[...] = o[:, H:2 * H]
    fz_fwd[...] = fz[:, 0:H];   fz_bwd[...] = fz[:, H:2 * H]

    # ---- bidirectional window-1 fo-pooling; h rows written via idle vst slot ----
    for b in range(B):                               # B=2, static unroll
        r0 = b * S
        cf = jnp.zeros((1, H), jnp.float32)          # forward cell state
        cb = jnp.zeros((1, H), jnp.float32)          # backward cell state
        for t in range(S):
            rt = r0 + t
            rr = r0 + (S - 1 - t)
            # forward direction, time t
            cf = f_fwd[rt:rt + 1, :] * cf + fz_fwd[rt:rt + 1, :]
            h_fwd[rt:rt + 1, :] = o_fwd[rt:rt + 1, :] * cf
            # backward direction, time S-1-t
            cb = f_bwd[rr:rr + 1, :] * cb + fz_bwd[rr:rr + 1, :]
            h_bwd[rr:rr + 1, :] = o_bwd[rr:rr + 1, :] * cb

    # ---- attention (hoisted: scores for both batches in one lane reduce) ----
    h = jnp.concatenate([h_fwd[...], h_bwd[...]], axis=1)        # (BS, 2H)
    h = jnp.maximum(h, 0.0)                                      # ReLU(rnn output)
    mu = pw_ref[ROW_MU:ROW_MU + 1, 0:2 * H]                      # (1, 2H)
    scores = jnp.sum(h * mu, axis=1, keepdims=True)              # (BS, 1)

    ctx_rows = []
    for b in range(B):                               # each batch = one 8-sublane group
        s_b = scores[b * S:(b + 1) * S, :]                       # (S, 1)
        m = jnp.max(s_b, axis=0, keepdims=True)
        e = jnp.exp(s_b - m)
        soft = e * pl.reciprocal(jnp.sum(e, axis=0, keepdims=True),
                                 approx=True)                    # softmax over time
        ctx_rows.append(jnp.sum(h[b * S:(b + 1) * S, :] * soft,
                                axis=0, keepdims=True))          # (1, 2H)
    ctx = jnp.maximum(jnp.concatenate(ctx_rows, axis=0), 0.0)    # (B, 2H), ReLU (matches ref)

    # ---- output linear ----
    wo = pw_ref[ROW_WO:ROW_WO + 2 * H, 0:OUT]                    # (2H, OUT)
    bo = pw_ref[ROW_BO:ROW_BO + 1, 0:OUT]                        # (1, OUT)
    out_ref[...] = jnp.dot(ctx, wo, preferred_element_type=jnp.float32) + bo


def qrnn7_forward(x, packed_params):
    """x: (B, S, 3) float32 -- columns [time0, time1, activity_id]."""
    B, S, _ = x.shape
    xt = x.reshape(B * S, 3).astype(jnp.float32)     # only remaining host-side glue

    kernel = functools.partial(qrnn7_kernel, B=B, S=S, H=HIDDEN, OUT=OUT_SIZE)
    return pl.pallas_call(                           # gridless: single invocation
        kernel,
        out_shape=jax.ShapeDtypeStruct((B, OUT_SIZE), jnp.float32),
        scratch_shapes=[pltpu.VMEM((B * S, HIDDEN), jnp.float32)] * 8,
    )(xt, packed_params)


def init_raw_params(key):
    """Parameters as the torch module holds them (Helpdesk branch)."""
    k = jax.random.split(key, 6)
    # nn.Embedding(ACT_VOCAB, 10, padding_idx=0)
    emb = jax.random.normal(k[0], (ACT_VOCAB, ACT_EMB), jnp.float32)
    emb = emb.at[0].set(0.0)
    # QRNN gate projections (window=1), each (EMB_DIM, 2H) for [fwd|bwd]
    def gate(kk):
        return (jax.random.normal(kk, (EMB_DIM, 2 * HIDDEN), jnp.float32)
                / math.sqrt(EMB_DIM))
    wz, wf, wog = gate(k[1]), gate(k[2]), gate(k[3])
    bz = jnp.zeros((2 * HIDDEN,), jnp.float32)
    bf = jnp.zeros((2 * HIDDEN,), jnp.float32)
    bog = jnp.zeros((2 * HIDDEN,), jnp.float32)
    # weight_Mu is an uninitialized nn.Parameter in torch; seed deterministically.
    mu = jax.random.normal(k[4], (2 * HIDDEN, 1), jnp.float32) * 0.1
    # self.out: Linear(2H, OUT) -> weight ~ N(0, 0.01), bias = 0 (per _initialize_weights)
    w_out = jax.random.normal(k[5], (OUT_SIZE, 2 * HIDDEN), jnp.float32) * 0.01
    b_out = jnp.zeros((OUT_SIZE,), jnp.float32)
    return emb, wz, wf, wog, bz, bf, bog, mu, w_out, b_out


def pack_params(emb, wz, wf, wog, bz, bf, bog, mu, w_out, b_out):
    """One-time packing: fold embedding into gate weights, build one VMEM buffer."""
    H = HIDDEN
    # fused gate weights, column order [f_f|f_b | o_f|o_b | z_f|z_b]
    wg = jnp.concatenate([wf, wog, wz], axis=1)                  # (EMB_DIM, 6H)
    bg = jnp.concatenate([bf, bog, bz], axis=0)                  # (6H,)
    # fold the embedding lookup:  emb[id] @ wg[2:]  ==  onehot(id) @ (emb @ wg[2:])
    wg_folded = jnp.concatenate([wg[:len(MIN_MAX)],
                                 emb @ wg[len(MIN_MAX):]], axis=0)   # (BIAS_LANE, 6H)
    pw = jnp.zeros((PW_ROWS, PW_COLS), jnp.float32)
    pw = pw.at[0:BIAS_LANE, :].set(wg_folded)
    pw = pw.at[BIAS_LANE, :].set(bg)                             # fused bias row
    pw = pw.at[ROW_MU, 0:2 * H].set(mu[:, 0])                    # weight_Mu^T
    pw = pw.at[ROW_WO:ROW_WO + 2 * H, 0:OUT_SIZE].set(w_out.T)   # (2H, OUT)
    pw = pw.at[ROW_BO, 0:OUT_SIZE].set(b_out)
    return pw


if __name__ == "__main__":
    key = jax.random.PRNGKey(0)
    kt, ki, kp = jax.random.split(key, 3)
    time_feats = jax.random.uniform(kt, (BATCH, SEQ, 2), jnp.float32)
    act_ids = jax.random.randint(ki, (BATCH, SEQ, 1), 1, ACT_VOCAB).astype(jnp.float32)
    x = jnp.concatenate([time_feats, act_ids], axis=2)           # (B, S, 3)

    pw = pack_params(*init_raw_params(kp))
    out = qrnn7_forward(x, pw)
    jax.block_until_ready(out)
    assert out.shape == (BATCH, OUT_SIZE)
    print("KERNEL_OK")
</pallas_src>

<mosaic_0001>
module attributes {stable_mosaic.version = 11 : i64} {
  func.func @qrnn7_kernel(%arg0: memref<16x3xf32, #tpu.memory_space<vmem>>, %arg1: memref<96x192xf32, #tpu.memory_space<vmem>>, %arg2: memref<2x5xf32, #tpu.memory_space<vmem>>, %arg3: memref<16x32xf32, #tpu.memory_space<vmem>>, %arg4: memref<16x32xf32, #tpu.memory_space<vmem>>, %arg5: memref<16x32xf32, #tpu.memory_space<vmem>>, %arg6: memref<16x32xf32, #tpu.memory_space<vmem>>, %arg7: memref<16x32xf32, #tpu.memory_space<vmem>>, %arg8: memref<16x32xf32, #tpu.memory_space<vmem>>, %arg9: memref<16x32xf32, #tpu.memory_space<vmem>>, %arg10: memref<16x32xf32, #tpu.memory_space<vmem>>) attributes {dimension_semantics = [], scalar_prefetch = 0 : i64, scratch_operands = 8 : i64, tpu.core_type = #tpu.core_type<tc>} {
    %0 = tpu.iota {dimensions = array<i32: 1>} : vector<16x16xi32>
    %c0 = arith.constant 0 : index
    %c2 = arith.constant 2 : index
    %1 = vector.load %arg0[%c0, %c2] : memref<16x3xf32, #tpu.memory_space<vmem>>, vector<16x1xf32>
    %2 = arith.fptosi %1 : vector<16x1xf32> to vector<16x1xi32>
    %c0_0 = arith.constant 0 : index
    %c0_1 = arith.constant 0 : index
    %3 = vector.load %arg0[%c0_0, %c0_1] : memref<16x3xf32, #tpu.memory_space<vmem>>, vector<16x1xf32>
    %c0_2 = arith.constant 0 : index
    %c1 = arith.constant 1 : index
    %4 = vector.load %arg0[%c0_2, %c1] : memref<16x3xf32, #tpu.memory_space<vmem>>, vector<16x1xf32>
    %c0_i32 = arith.constant 0 : i32
    %5 = vector.broadcast %c0_i32 : i32 to vector<16x16xi32>
    %6 = arith.cmpi eq, %0, %5 : vector<16x16xi32>
    %cst = arith.constant 0.000000e+00 : f32
    %7 = vector.shape_cast %3 : vector<16x1xf32> to vector<16x1xf32>
    %8 = vector.broadcast %7 : vector<16x1xf32> to vector<16x16xf32>
    %9 = vector.broadcast %cst : f32 to vector<16x16xf32>
    %10 = arith.select %6, %8, %9 : vector<16x16xi1>, vector<16x16xf32>
    %c1_i32 = arith.constant 1 : i32
    %11 = vector.broadcast %c1_i32 : i32 to vector<16x16xi32>
    %12 = arith.cmpi eq, %0, %11 : vector<16x16xi32>
    %cst_3 = arith.constant 0.000000e+00 : f32
    %13 = vector.shape_cast %4 : vector<16x1xf32> to vector<16x1xf32>
    %14 = vector.broadcast %13 : vector<16x1xf32> to vector<16x16xf32>
    %15 = vector.broadcast %cst_3 : f32 to vector<16x16xf32>
    %16 = arith.select %12, %14, %15 : vector<16x16xi1>, vector<16x16xf32>
    %17 = arith.addf %10, %16 : vector<16x16xf32>
    %c2_i32 = arith.constant 2 : i32
    %18 = vector.broadcast %c2_i32 : i32 to vector<16x1xi32>
    %19 = arith.addi %2, %18 : vector<16x1xi32>
    %20 = vector.broadcast %19 : vector<16x1xi32> to vector<16x16xi32>
    %21 = arith.cmpi eq, %0, %20 : vector<16x16xi32>
    %22 = arith.extui %21 : vector<16x16xi1> to vector<16x16xi32>
    %23 = arith.sitofp %22 : vector<16x16xi32> to vector<16x16xf32>
    %24 = arith.addf %17, %23 : vector<16x16xf32>
    %c12_i32 = arith.constant 12 : i32
    %25 = vector.broadcast %c12_i32 : i32 to vector<16x16xi32>
    %26 = arith.cmpi eq, %0, %25 : vector<16x16xi32>
    %27 = arith.extui %26 : vector<16x16xi1> to vector<16x16xi32>
    %28 = arith.sitofp %27 : vector<16x16xi32> to vector<16x16xf32>
    %29 = arith.addf %24, %28 : vector<16x16xf32>
    %c0_4 = arith.constant 0 : index
    %c0_5 = arith.constant 0 : index
    %30 = vector.load %arg1[%c0_4, %c0_5] : memref<96x192xf32, #tpu.memory_space<vmem>>, vector<16x192xf32>
    %cst_6 = arith.constant dense<0.000000e+00> : vector<16x192xf32>
    %31 = tpu.matmul %29, %30, %cst_6 {dimension_numbers = #tpu.dot_dimension_numbers<[1], [0], [0], [1], [0, 0, 1, 1], [], []>} : vector<16x16xf32>, vector<16x192xf32>, vector<16x192xf32> -> vector<16x192xf32>
    %32 = vector.extract_strided_slice %31 {offsets = [0, 0], sizes = [16, 128], strides = [1, 1]} : vector<16x192xf32> to vector<16x128xf32>
    %cst_7 = arith.constant 0.000000e+00 : f32
    %33 = vector.broadcast %cst_7 : f32 to vector<16x128xf32>
    %34 = arith.subf %33, %32 : vector<16x128xf32>
    %35 = math.exp %34 : vector<16x128xf32>
    %cst_8 = arith.constant 1.000000e+00 : f32
    %36 = vector.broadcast %cst_8 : f32 to vector<16x128xf32>
    %37 = arith.addf %36, %35 : vector<16x128xf32>
    %cst_9 = arith.constant 1.000000e+00 : f32
    %38 = vector.broadcast %cst_9 : f32 to vector<16x128xf32>
    %39 = arith.divf %38, %37 : vector<16x128xf32>
    %40 = vector.extract_strided_slice %31 {offsets = [0, 128], sizes = [16, 64], strides = [1, 1]} : vector<16x192xf32> to vector<16x64xf32>
    %41 = math.tanh %40 : vector<16x64xf32>
    %42 = vector.extract_strided_slice %39 {offsets = [0, 0], sizes = [16, 64], strides = [1, 1]} : vector<16x128xf32> to vector<16x64xf32>
    %43 = vector.extract_strided_slice %39 {offsets = [0, 64], sizes = [16, 64], strides = [1, 1]} : vector<16x128xf32> to vector<16x64xf32>
    %cst_10 = arith.constant 1.000000e+00 : f32
    %44 = vector.broadcast %cst_10 : f32 to vector<16x64xf32>
    %45 = arith.subf %44, %42 : vector<16x64xf32>
    %46 = arith.mulf %45, %41 : vector<16x64xf32>
    %47 = vector.extract_strided_slice %42 {offsets = [0, 0], sizes = [16, 32], strides = [1, 1]} : vector<16x64xf32> to vector<16x32xf32>
    %c0_11 = arith.constant 0 : index
    %c0_12 = arith.constant 0 : index
    %48 = vector.load %arg3[%c0_11, %c0_12] : memref<16x32xf32, #tpu.memory_space<vmem>>, vector<16x32xf32>
    tpu.vector_store %arg3[%c0_11, %c0_12], %47 {strides = array<i32>} : memref<16x32xf32, #tpu.memory_space<vmem>>, vector<16x32xf32>,
    %49 = vector.extract_strided_slice %42 {offsets = [0, 32], sizes = [16, 32], strides = [1, 1]} : vector<16x64xf32> to vector<16x32xf32>
    %c0_13 = arith.constant 0 : index
    %c0_14 = arith.constant 0 : index
    %50 = vector.load %arg4[%c0_13, %c0_14] : memref<16x32xf32, #tpu.memory_space<vmem>>, vector<16x32xf32>
    tpu.vector_store %arg4[%c0_13, %c0_14], %49 {strides = array<i32>} : memref<16x32xf32, #tpu.memory_space<vmem>>, vector<16x32xf32>,
    %51 = vector.extract_strided_slice %43 {offsets = [0, 0], sizes = [16, 32], strides = [1, 1]} : vector<16x64xf32> to vector<16x32xf32>
    %c0_15 = arith.constant 0 : index
    %c0_16 = arith.constant 0 : index
    %52 = vector.load %arg5[%c0_15, %c0_16] : memref<16x32xf32, #tpu.memory_space<vmem>>, vector<16x32xf32>
    tpu.vector_store %arg5[%c0_15, %c0_16], %51 {strides = array<i32>} : memref<16x32xf32, #tpu.memory_space<vmem>>, vector<16x32xf32>,
    %53 = vector.extract_strided_slice %43 {offsets = [0, 32], sizes = [16, 32], strides = [1, 1]} : vector<16x64xf32> to vector<16x32xf32>
    %c0_17 = arith.constant 0 : index
    %c0_18 = arith.constant 0 : index
    %54 = vector.load %arg6[%c0_17, %c0_18] : memref<16x32xf32, #tpu.memory_space<vmem>>, vector<16x32xf32>
    tpu.vector_store %arg6[%c0_17, %c0_18], %53 {strides = array<i32>} : memref<16x32xf32, #tpu.memory_space<vmem>>, vector<16x32xf32>,
    %55 = vector.extract_strided_slice %46 {offsets = [0, 0], sizes = [16, 32], strides = [1, 1]} : vector<16x64xf32> to vector<16x32xf32>
    %c0_19 = arith.constant 0 : index
    %c0_20 = arith.constant 0 : index
    %56 = vector.load %arg7[%c0_19, %c0_20] : memref<16x32xf32, #tpu.memory_space<vmem>>, vector<16x32xf32>
    tpu.vector_store %arg7[%c0_19, %c0_20], %55 {strides = array<i32>} : memref<16x32xf32, #tpu.memory_space<vmem>>, vector<16x32xf32>,
    %57 = vector.extract_strided_slice %46 {offsets = [0, 32], sizes = [16, 32], strides = [1, 1]} : vector<16x64xf32> to vector<16x32xf32>
    %c0_21 = arith.constant 0 : index
    %c0_22 = arith.constant 0 : index
    %58 = vector.load %arg8[%c0_21, %c0_22] : memref<16x32xf32, #tpu.memory_space<vmem>>, vector<16x32xf32>
    tpu.vector_store %arg8[%c0_21, %c0_22], %57 {strides = array<i32>} : memref<16x32xf32, #tpu.memory_space<vmem>>, vector<16x32xf32>,
    %cst_23 = arith.constant 0.000000e+00 : f32
    %59 = vector.broadcast %cst_23 : f32 to vector<1x32xf32>
    %cst_24 = arith.constant 0.000000e+00 : f32
    %60 = vector.broadcast %cst_24 : f32 to vector<1x32xf32>
    %c0_25 = arith.constant 0 : index
    %c0_26 = arith.constant 0 : index
    %61 = vector.load %arg3[%c0_25, %c0_26] : memref<16x32xf32, #tpu.memory_space<vmem>>, vector<1x32xf32>
    %62 = arith.mulf %61, %59 : vector<1x32xf32>
    %c0_27 = arith.constant 0 : index
    %c0_28 = arith.constant 0 : index
    %63 = vector.load %arg7[%c0_27, %c0_28] : memref<16x32xf32, #tpu.memory_space<vmem>>, vector<1x32xf32>
    %64 = arith.addf %62, %63 : vector<1x32xf32>
    %c0_29 = arith.constant 0 : index
    %c0_30 = arith.constant 0 : index
    %65 = vector.load %arg5[%c0_29, %c0_30] : memref<16x32xf32, #tpu.memory_space<vmem>>, vector<1x32xf32>
    %66 = arith.mulf %65, %64 : vector<1x32xf32>
    %c0_31 = arith.constant 0 : index
    %c0_32 = arith.constant 0 : index
    %67 = vector.load %arg9[%c0_31, %c0_32] : memref<16x32xf32, #tpu.memory_space<vmem>>, vector<1x32xf32>
    tpu.vector_store %arg9[%c0_31, %c0_32], %66 {strides = array<i32>} : memref<16x32xf32, #tpu.memory_space<vmem>>, vector<1x32xf32>,
    %c7 = arith.constant 7 : index
    %c0_33 = arith.constant 0 : index
    %68 = vector.load %arg4[%c7, %c0_33] : memref<16x32xf32, #tpu.memory_space<vmem>>, vector<1x32xf32>
    %69 = arith.mulf %68, %60 : vector<1x32xf32>
    %c7_34 = arith.constant 7 : index
    %c0_35 = arith.constant 0 : index
    %70 = vector.load %arg8[%c7_34, %c0_35] : memref<16x32xf32, #tpu.memory_space<vmem>>, vector<1x32xf32>
    %71 = arith.addf %69, %70 : vector<1x32xf32>
    %c7_36 = arith.constant 7 : index
    %c0_37 = arith.constant 0 : index
    %72 = vector.load %arg6[%c7_36, %c0_37] : memref<16x32xf32, #tpu.memory_space<vmem>>, vector<1x32xf32>
    %73 = arith.mulf %72, %71 : vector<1x32xf32>
    %c7_38 = arith.constant 7 : index
    %c0_39 = arith.constant 0 : index
    %74 = vector.load %arg10[%c7_38, %c0_39] : memref<16x32xf32, #tpu.memory_space<vmem>>, vector<1x32xf32>
    tpu.vector_store %arg10[%c7_38, %c0_39], %73 {strides = array<i32>} : memref<16x32xf32, #tpu.memory_space<vmem>>, vector<1x32xf32>,
    %c1_40 = arith.constant 1 : index
    %c0_41 = arith.constant 0 : index
    %75 = vector.load %arg3[%c1_40, %c0_41] : memref<16x32xf32, #tpu.memory_space<vmem>>, vector<1x32xf32>
    %76 = arith.mulf %75, %64 : vector<1x32xf32>
    %c1_42 = arith.constant 1 : index
    %c0_43 = arith.constant 0 : index
    %77 = vector.load %arg7[%c1_42, %c0_43] : memref<16x32xf32, #tpu.memory_space<vmem>>, vector<1x32xf32>
    %78 = arith.addf %76, %77 : vector<1x32xf32>
    %c1_44 = arith.constant 1 : index
    %c0_45 = arith.constant 0 : index
    %79 = vector.load %arg5[%c1_44, %c0_45] : memref<16x32xf32, #tpu.memory_space<vmem>>, vector<1x32xf32>
    %80 = arith.mulf %79, %78 : vector<1x32xf32>
    %c1_46 = arith.constant 1 : index
    %c0_47 = arith.constant 0 : index
    %81 = vector.load %arg9[%c1_46, %c0_47] : memref<16x32xf32, #tpu.memory_space<vmem>>, vector<1x32xf32>
    tpu.vector_store %arg9[%c1_46, %c0_47], %80 {strides = array<i32>} : memref<16x32xf32, #tpu.memory_space<vmem>>, vector<1x32xf32>,
    %c6 = arith.constant 6 : index
    %c0_48 = arith.constant 0 : index
    %82 = vector.load %arg4[%c6, %c0_48] : memref<16x32xf32, #tpu.memory_space<vmem>>, vector<1x32xf32>
    %83 = arith.mulf %82, %71 : vector<1x32xf32>
    %c6_49 = arith.constant 6 : index
    %c0_50 = arith.constant 0 : index
    %84 = vector.load %arg8[%c6_49, %c0_50] : memref<16x32xf32, #tpu.memory_space<vmem>>, vector<1x32xf32>
    %85 = arith.addf %83, %84 : vector<1x32xf32>
    %c6_51 = arith.constant 6 : index
    %c0_52 = arith.constant 0 : index
    %86 = vector.load %arg6[%c6_51, %c0_52] : memref<16x32xf32, #tpu.memory_space<vmem>>, vector<1x32xf32>
    %87 = arith.mulf %86, %85 : vector<1x32xf32>
    %c6_53 = arith.constant 6 : index
    %c0_54 = arith.constant 0 : index
    %88 = vector.load %arg10[%c6_53, %c0_54] : memref<16x32xf32, #tpu.memory_space<vmem>>, vector<1x32xf32>
    tpu.vector_store %arg10[%c6_53, %c0_54], %87 {strides = array<i32>} : memref<16x32xf32, #tpu.memory_space<vmem>>, vector<1x32xf32>,
    %c2_55 = arith.constant 2 : index
    %c0_56 = arith.constant 0 : index
    %89 = vector.load %arg3[%c2_55, %c0_56] : memref<16x32xf32, #tpu.memory_space<vmem>>, vector<1x32xf32>
    %90 = arith.mulf %89, %78 : vector<1x32xf32>
    %c2_57 = arith.constant 2 : index
    %c0_58 = arith.constant 0 : index
    %91 = vector.load %arg7[%c2_57, %c0_58] : memref<16x32xf32, #tpu.memory_space<vmem>>, vector<1x32xf32>
    %92 = arith.addf %90, %91 : vector<1x32xf32>
    %c2_59 = arith.constant 2 : index
    %c0_60 = arith.constant 0 : index
    %93 = vector.load %arg5[%c2_59, %c0_60] : memref<16x32xf32, #tpu.memory_space<vmem>>, vector<1x32xf32>
    %94 = arith.mulf %93, %92 : vector<1x32xf32>
    %c2_61 = arith.constant 2 : index
    %c0_62 = arith.constant 0 : index
    %95 = vector.load %arg9[%c2_61, %c0_62] : memref<16x32xf32, #tpu.memory_space<vmem>>, vector<1x32xf32>
    tpu.vector_store %arg9[%c2_61, %c0_62], %94 {strides = array<i32>} : memref<16x32xf32, #tpu.memory_space<vmem>>, vector<1x32xf32>,
    %c5 = arith.constant 5 : index
    %c0_63 = arith.constant 0 : index
    %96 = vector.load %arg4[%c5, %c0_63] : memref<16x32xf32, #tpu.memory_space<vmem>>, vector<1x32xf32>
    %97 = arith.mulf %96, %85 : vector<1x32xf32>
    %c5_64 = arith.constant 5 : index
    %c0_65 = arith.constant 0 : index
    %98 = vector.load %arg8[%c5_64, %c0_65] : memref<16x32xf32, #tpu.memory_space<vmem>>, vector<1x32xf32>
    %99 = arith.addf %97, %98 : vector<1x32xf32>
    %c5_66 = arith.constant 5 : index
    %c0_67 = arith.constant 0 : index
    %100 = vector.load %arg6[%c5_66, %c0_67] : memref<16x32xf32, #tpu.memory_space<vmem>>, vector<1x32xf32>
    %101 = arith.mulf %100, %99 : vector<1x32xf32>
    %c5_68 = arith.constant 5 : index
    %c0_69 = arith.constant 0 : index
    %102 = vector.load %arg10[%c5_68, %c0_69] : memref<16x32xf32, #tpu.memory_space<vmem>>, vector<1x32xf32>
    tpu.vector_store %arg10[%c5_68, %c0_69], %101 {strides = array<i32>} : memref<16x32xf32, #tpu.memory_space<vmem>>, vector<1x32xf32>,
    %c3 = arith.constant 3 : index
    %c0_70 = arith.constant 0 : index
    %103 = vector.load %arg3[%c3, %c0_70] : memref<16x32xf32, #tpu.memory_space<vmem>>, vector<1x32xf32>
    %104 = arith.mulf %103, %92 : vector<1x32xf32>
    %c3_71 = arith.constant 3 : index
    %c0_72 = arith.constant 0 : index
    %105 = vector.load %arg7[%c3_71, %c0_72] : memref<16x32xf32, #tpu.memory_space<vmem>>, vector<1x32xf32>
    %106 = arith.addf %104, %105 : vector<1x32xf32>
    %c3_73 = arith.constant 3 : index
    %c0_74 = arith.constant 0 : index
    %107 = vector.load %arg5[%c3_73, %c0_74] : memref<16x32xf32, #tpu.memory_space<vmem>>, vector<1x32xf32>
    %108 = arith.mulf %107, %106 : vector<1x32xf32>
    %c3_75 = arith.constant 3 : index
    %c0_76 = arith.constant 0 : index
    %109 = vector.load %arg9[%c3_75, %c0_76] : memref<16x32xf32, #tpu.memory_space<vmem>>, vector<1x32xf32>
    tpu.vector_store %arg9[%c3_75, %c0_76], %108 {strides = array<i32>} : memref<16x32xf32, #tpu.memory_space<vmem>>, vector<1x32xf32>,
    %c4 = arith.constant 4 : index
    %c0_77 = arith.constant 0 : index
    %110 = vector.load %arg4[%c4, %c0_77] : memref<16x32xf32, #tpu.memory_space<vmem>>, vector<1x32xf32>
    %111 = arith.mulf %110, %99 : vector<1x32xf32>
    %c4_78 = arith.constant 4 : index
    %c0_79 = arith.constant 0 : index
    %112 = vector.load %arg8[%c4_78, %c0_79] : memref<16x32xf32, #tpu.memory_space<vmem>>, vector<1x32xf32>
    %113 = arith.addf %111, %112 : vector<1x32xf32>
    %c4_80 = arith.constant 4 : index
    %c0_81 = arith.constant 0 : index
    %114 = vector.load %arg6[%c4_80, %c0_81] : memref<16x32xf32, #tpu.memory_space<vmem>>, vector<1x32xf32>
    %115 = arith.mulf %114, %113 : vector<1x32xf32>
    %c4_82 = arith.constant 4 : index
    %c0_83 = arith.constant 0 : index
    %116 = vector.load %arg10[%c4_82, %c0_83] : memref<16x32xf32, #tpu.memory_space<vmem>>, vector<1x32xf32>
    tpu.vector_store %arg10[%c4_82, %c0_83], %115 {strides = array<i32>} : memref<16x32xf32, #tpu.memory_space<vmem>>, vector<1x32xf32>,
    %c4_84 = arith.constant 4 : index
    %c0_85 = arith.constant 0 : index
    %117 = vector.load %arg3[%c4_84, %c0_85] : memref<16x32xf32, #tpu.memory_space<vmem>>, vector<1x32xf32>
    %118 = arith.mulf %117, %106 : vector<1x32xf32>
    %c4_86 = arith.constant 4 : index
    %c0_87 = arith.constant 0 : index
    %119 = vector.load %arg7[%c4_86, %c0_87] : memref<16x32xf32, #tpu.memory_space<vmem>>, vector<1x32xf32>
    %120 = arith.addf %118, %119 : vector<1x32xf32>
    %c4_88 = arith.constant 4 : index
    %c0_89 = arith.constant 0 : index
    %121 = vector.load %arg5[%c4_88, %c0_89] : memref<16x32xf32, #tpu.memory_space<vmem>>, vector<1x32xf32>
    %122 = arith.mulf %121, %120 : vector<1x32xf32>
    %c4_90 = arith.constant 4 : index
    %c0_91 = arith.constant 0 : index
    %123 = vector.load %arg9[%c4_90, %c0_91] : memref<16x32xf32, #tpu.memory_space<vmem>>, vector<1x32xf32>
    tpu.vector_store %arg9[%c4_90, %c0_91], %122 {strides = array<i32>} : memref<16x32xf32, #tpu.memory_space<vmem>>, vector<1x32xf32>,
    %c3_92 = arith.constant 3 : index
    %c0_93 = arith.constant 0 : index
    %124 = vector.load %arg4[%c3_92, %c0_93] : memref<16x32xf32, #tpu.memory_space<vmem>>, vector<1x32xf32>
    %125 = arith.mulf %124, %113 : vector<1x32xf32>
    %c3_94 = arith.constant 3 : index
    %c0_95 = arith.constant 0 : index
    %126 = vector.load %arg8[%c3_94, %c0_95] : memref<16x32xf32, #tpu.memory_space<vmem>>, vector<1x32xf32>
    %127 = arith.addf %125, %126 : vector<1x32xf32>
    %c3_96 = arith.constant 3 : index
    %c0_97 = arith.constant 0 : index
    %128 = vector.load %arg6[%c3_96, %c0_97] : memref<16x32xf32, #tpu.memory_space<vmem>>, vector<1x32xf32>
    %129 = arith.mulf %128, %127 : vector<1x32xf32>
    %c3_98 = arith.constant 3 : index
    %c0_99 = arith.constant 0 : index
    %130 = vector.load %arg10[%c3_98, %c0_99] : memref<16x32xf32, #tpu.memory_space<vmem>>, vector<1x32xf32>
    tpu.vector_store %arg10[%c3_98, %c0_99], %129 {strides = array<i32>} : memref<16x32xf32, #tpu.memory_space<vmem>>, vector<1x32xf32>,
    %c5_100 = arith.constant 5 : index
    %c0_101 = arith.constant 0 : index
    %131 = vector.load %arg3[%c5_100, %c0_101] : memref<16x32xf32, #tpu.memory_space<vmem>>, vector<1x32xf32>
    %132 = arith.mulf %131, %120 : vector<1x32xf32>
    %c5_102 = arith.constant 5 : index
    %c0_103 = arith.constant 0 : index
    %133 = vector.load %arg7[%c5_102, %c0_103] : memref<16x32xf32, #tpu.memory_space<vmem>>, vector<1x32xf32>
    %134 = arith.addf %132, %133 : vector<1x32xf32>
    %c5_104 = arith.constant 5 : index
    %c0_105 = arith.constant 0 : index
    %135 = vector.load %arg5[%c5_104, %c0_105] : memref<16x32xf32, #tpu.memory_space<vmem>>, vector<1x32xf32>
    %136 = arith.mulf %135, %134 : vector<1x32xf32>
    %c5_106 = arith.constant 5 : index
    %c0_107 = arith.constant 0 : index
    %137 = vector.load %arg9[%c5_106, %c0_107] : memref<16x32xf32, #tpu.memory_space<vmem>>, vector<1x32xf32>
    tpu.vector_store %arg9[%c5_106, %c0_107], %136 {strides = array<i32>} : memref<16x32xf32, #tpu.memory_space<vmem>>, vector<1x32xf32>,
    %c2_108 = arith.constant 2 : index
    %c0_109 = arith.constant 0 : index
    %138 = vector.load %arg4[%c2_108, %c0_109] : memref<16x32xf32, #tpu.memory_space<vmem>>, vector<1x32xf32>
    %139 = arith.mulf %138, %127 : vector<1x32xf32>
    %c2_110 = arith.constant 2 : index
    %c0_111 = arith.constant 0 : index
    %140 = vector.load %arg8[%c2_110, %c0_111] : memref<16x32xf32, #tpu.memory_space<vmem>>, vector<1x32xf32>
    %141 = arith.addf %139, %140 : vector<1x32xf32>
    %c2_112 = arith.constant 2 : index
    %c0_113 = arith.constant 0 : index
    %142 = vector.load %arg6[%c2_112, %c0_113] : memref<16x32xf32, #tpu.memory_space<vmem>>, vector<1x32xf32>
    %143 = arith.mulf %142, %141 : vector<1x32xf32>
    %c2_114 = arith.constant 2 : index
    %c0_115 = arith.constant 0 : index
    %144 = vector.load %arg10[%c2_114, %c0_115] : memref<16x32xf32, #tpu.memory_space<vmem>>, vector<1x32xf32>
    tpu.vector_store %arg10[%c2_114, %c0_115], %143 {strides = array<i32>} : memref<16x32xf32, #tpu.memory_space<vmem>>, vector<1x32xf32>,
    %c6_116 = arith.constant 6 : index
    %c0_117 = arith.constant 0 : index
    %145 = vector.load %arg3[%c6_116, %c0_117] : memref<16x32xf32, #tpu.memory_space<vmem>>, vector<1x32xf32>
    %146 = arith.mulf %145, %134 : vector<1x32xf32>
    %c6_118 = arith.constant 6 : index
    %c0_119 = arith.constant 0 : index
    %147 = vector.load %arg7[%c6_118, %c0_119] : memref<16x32xf32, #tpu.memory_space<vmem>>, vector<1x32xf32>
    %148 = arith.addf %146, %147 : vector<1x32xf32>
    %c6_120 = arith.constant 6 : index
    %c0_121 = arith.constant 0 : index
    %149 = vector.load %arg5[%c6_120, %c0_121] : memref<16x32xf32, #tpu.memory_space<vmem>>, vector<1x32xf32>
    %150 = arith.mulf %149, %148 : vector<1x32xf32>
    %c6_122 = arith.constant 6 : index
    %c0_123 = arith.constant 0 : index
    %151 = vector.load %arg9[%c6_122, %c0_123] : memref<16x32xf32, #tpu.memory_space<vmem>>, vector<1x32xf32>
    tpu.vector_store %arg9[%c6_122, %c0_123], %150 {strides = array<i32>} : memref<16x32xf32, #tpu.memory_space<vmem>>, vector<1x32xf32>,
    %c1_124 = arith.constant 1 : index
    %c0_125 = arith.constant 0 : index
    %152 = vector.load %arg4[%c1_124, %c0_125] : memref<16x32xf32, #tpu.memory_space<vmem>>, vector<1x32xf32>
    %153 = arith.mulf %152, %141 : vector<1x32xf32>
    %c1_126 = arith.constant 1 : index
    %c0_127 = arith.constant 0 : index
    %154 = vector.load %arg8[%c1_126, %c0_127] : memref<16x32xf32, #tpu.memory_space<vmem>>, vector<1x32xf32>
    %155 = arith.addf %153, %154 : vector<1x32xf32>
    %c1_128 = arith.constant 1 : index
    %c0_129 = arith.constant 0 : index
    %156 = vector.load %arg6[%c1_128, %c0_129] : memref<16x32xf32, #tpu.memory_space<vmem>>, vector<1x32xf32>
    %157 = arith.mulf %156, %155 : vector<1x32xf32>
    %c1_130 = arith.constant 1 : index
    %c0_131 = arith.constant 0 : index
    %158 = vector.load %arg10[%c1_130, %c0_131] : memref<16x32xf32, #tpu.memory_space<vmem>>, vector<1x32xf32>
    tpu.vector_store %arg10[%c1_130, %c0_131], %157 {strides = array<i32>} : memref<16x32xf32, #tpu.memory_space<vmem>>, vector<1x32xf32>,
    %c7_132 = arith.constant 7 : index
    %c0_133 = arith.constant 0 : index
    %159 = vector.load %arg3[%c7_132, %c0_133] : memref<16x32xf32, #tpu.memory_space<vmem>>, vector<1x32xf32>
    %160 = arith.mulf %159, %148 : vector<1x32xf32>
    %c7_134 = arith.constant 7 : index
    %c0_135 = arith.constant 0 : index
    %161 = vector.load %arg7[%c7_134, %c0_135] : memref<16x32xf32, #tpu.memory_space<vmem>>, vector<1x32xf32>
    %162 = arith.addf %160, %161 : vector<1x32xf32>
    %c7_136 = arith.constant 7 : index
    %c0_137 = arith.constant 0 : index
    %163 = vector.load %arg5[%c7_136, %c0_137] : memref<16x32xf32, #tpu.memory_space<vmem>>, vector<1x32xf32>
    %164 = arith.mulf %163, %162 : vector<1x32xf32>
    %c7_138 = arith.constant 7 : index
    %c0_139 = arith.constant 0 : index
    %165 = vector.load %arg9[%c7_138, %c0_139] : memref<16x32xf32, #tpu.memory_space<vmem>>, vector<1x32xf32>
    tpu.vector_store %arg9[%c7_138, %c0_139], %164 {strides = array<i32>} : memref<16x32xf32, #tpu.memory_space<vmem>>, vector<1x32xf32>,
    %c0_140 = arith.constant 0 : index
    %c0_141 = arith.constant 0 : index
    %166 = vector.load %arg4[%c0_140, %c0_141] : memref<16x32xf32, #tpu.memory_space<vmem>>, vector<1x32xf32>
    %167 = arith.mulf %166, %155 : vector<1x32xf32>
    %c0_142 = arith.constant 0 : index
    %c0_143 = arith.constant 0 : index
    %168 = vector.load %arg8[%c0_142, %c0_143] : memref<16x32xf32, #tpu.memory_space<vmem>>, vector<1x32xf32>
    %169 = arith.addf %167, %168 : vector<1x32xf32>
    %c0_144 = arith.constant 0 : index
    %c0_145 = arith.constant 0 : index
    %170 = vector.load %arg6[%c0_144, %c0_145] : memref<16x32xf32, #tpu.memory_space<vmem>>, vector<1x32xf32>
    %171 = arith.mulf %170, %169 : vector<1x32xf32>
    %c0_146 = arith.constant 0 : index
    %c0_147 = arith.constant 0 : index
    %172 = vector.load %arg10[%c0_146, %c0_147] : memref<16x32xf32, #tpu.memory_space<vmem>>, vector<1x32xf32>
    tpu.vector_store %arg10[%c0_146, %c0_147], %171 {strides = array<i32>} : memref<16x32xf32, #tpu.memory_space<vmem>>, vector<1x32xf32>,
    %cst_148 = arith.constant 0.000000e+00 : f32
    %173 = vector.broadcast %cst_148 : f32 to vector<1x32xf32>
    %cst_149 = arith.constant 0.000000e+00 : f32
    %174 = vector.broadcast %cst_149 : f32 to vector<1x32xf32>
    %c8 = arith.constant 8 : index
    %c0_150 = arith.constant 0 : index
    %175 = vector.load %arg3[%c8, %c0_150] : memref<16x32xf32, #tpu.memory_space<vmem>>, vector<1x32xf32>
    %176 = arith.mulf %175, %173 : vector<1x32xf32>
    %c8_151 = arith.constant 8 : index
    %c0_152 = arith.constant 0 : index
    %177 = vector.load %arg7[%c8_151, %c0_152] : memref<16x32xf32, #tpu.memory_space<vmem>>, vector<1x32xf32>
    %178 = arith.addf %176, %177 : vector<1x32xf32>
    %c8_153 = arith.constant 8 : index
    %c0_154 = arith.constant 0 : index
    %179 = vector.load %arg5[%c8_153, %c0_154] : memref<16x32xf32, #tpu.memory_space<vmem>>, vector<1x32xf32>
    %180 = arith.mulf %179, %178 : vector<1x32xf32>
    %c8_155 = arith.constant 8 : index
    %c0_156 = arith.constant 0 : index
    %181 = vector.load %arg9[%c8_155, %c0_156] : memref<16x32xf32, #tpu.memory_space<vmem>>, vector<1x32xf32>
    tpu.vector_store %arg9[%c8_155, %c0_156], %180 {strides = array<i32>} : memref<16x32xf32, #tpu.memory_space<vmem>>, vector<1x32xf32>,
    %c15 = arith.constant 15 : index
    %c0_157 = arith.constant 0 : index
    %182 = vector.load %arg4[%c15, %c0_157] : memref<16x32xf32, #tpu.memory_space<vmem>>, vector<1x32xf32>
    %183 = arith.mulf %182, %174 : vector<1x32xf32>
    %c15_158 = arith.constant 15 : index
    %c0_159 = arith.constant 0 : index
    %184 = vector.load %arg8[%c15_158, %c0_159] : memref<16x32xf32, #tpu.memory_space<vmem>>, vector<1x32xf32>
    %185 = arith.addf %183, %184 : vector<1x32xf32>
    %c15_160 = arith.constant 15 : index
    %c0_161 = arith.constant 0 : index
    %186 = vector.load %arg6[%c15_160, %c0_161] : memref<16x32xf32, #tpu.memory_space<vmem>>, vector<1x32xf32>
    %187 = arith.mulf %186, %185 : vector<1x32xf32>
    %c15_162 = arith.constant 15 : index
    %c0_163 = arith.constant 0 : index
    %188 = vector.load %arg10[%c15_162, %c0_163] : memref<16x32xf32, #tpu.memory_space<vmem>>, vector<1x32xf32>
    tpu.vector_store %arg10[%c15_162, %c0_163], %187 {strides = array<i32>} : memref<16x32xf32, #tpu.memory_space<vmem>>, vector<1x32xf32>,
    %c9 = arith.constant 9 : index
    %c0_164 = arith.constant 0 : index
    %189 = vector.load %arg3[%c9, %c0_164] : memref<16x32xf32, #tpu.memory_space<vmem>>, vector<1x32xf32>
    %190 = arith.mulf %189, %178 : vector<1x32xf32>
    %c9_165 = arith.constant 9 : index
    %c0_166 = arith.constant 0 : index
    %191 = vector.load %arg7[%c9_165, %c0_166] : memref<16x32xf32, #tpu.memory_space<vmem>>, vector<1x32xf32>
    %192 = arith.addf %190, %191 : vector<1x32xf32>
    %c9_167 = arith.constant 9 : index
    %c0_168 = arith.constant 0 : index
    %193 = vector.load %arg5[%c9_167, %c0_168] : memref<16x32xf32, #tpu.memory_space<vmem>>, vector<1x32xf32>
    %194 = arith.mulf %193, %192 : vector<1x32xf32>
    %c9_169 = arith.constant 9 : index
    %c0_170 = arith.constant 0 : index
    %195 = vector.load %arg9[%c9_169, %c0_170] : memref<16x32xf32, #tpu.memory_space<vmem>>, vector<1x32xf32>
    tpu.vector_store %arg9[%c9_169, %c0_170], %194 {strides = array<i32>} : memref<16x32xf32, #tpu.memory_space<vmem>>, vector<1x32xf32>,
    %c14 = arith.constant 14 : index
    %c0_171 = arith.constant 0 : index
    %196 = vector.load %arg4[%c14, %c0_171] : memref<16x32xf32, #tpu.memory_space<vmem>>, vector<1x32xf32>
    %197 = arith.mulf %196, %185 : vector<1x32xf32>
    %c14_172 = arith.constant 14 : index
    %c0_173 = arith.constant 0 : index
    %198 = vector.load %arg8[%c14_172, %c0_173] : memref<16x32xf32, #tpu.memory_space<vmem>>, vector<1x32xf32>
    %199 = arith.addf %197, %198 : vector<1x32xf32>
    %c14_174 = arith.constant 14 : index
    %c0_175 = arith.constant 0 : index
    %200 = vector.load %arg6[%c14_174, %c0_175] : memref<16x32xf32, #tpu.memory_space<vmem>>, vector<1x32xf32>
    %201 = arith.mulf %200, %199 : vector<1x32xf32>
    %c14_176 = arith.constant 14 : index
    %c0_177 = arith.constant 0 : index
    %202 = vector.load %arg10[%c14_176, %c0_177] : memref<16x32xf32, #tpu.memory_space<vmem>>, vector<1x32xf32>
    tpu.vector_store %arg10[%c14_176, %c0_177], %201 {strides = array<i32>} : memref<16x32xf32, #tpu.memory_space<vmem>>, vector<1x32xf32>,
    %c10 = arith.constant 10 : index
    %c0_178 = arith.constant 0 : index
    %203 = vector.load %arg3[%c10, %c0_178] : memref<16x32xf32, #tpu.memory_space<vmem>>, vector<1x32xf32>
    %204 = arith.mulf %203, %192 : vector<1x32xf32>
    %c10_179 = arith.constant 10 : index
    %c0_180 = arith.constant 0 : index
    %205 = vector.load %arg7[%c10_179, %c0_180] : memref<16x32xf32, #tpu.memory_space<vmem>>, vector<1x32xf32>
    %206 = arith.addf %204, %205 : vector<1x32xf32>
    %c10_181 = arith.constant 10 : index
    %c0_182 = arith.constant 0 : index
    %207 = vector.load %arg5[%c10_181, %c0_182] : memref<16x32xf32, #tpu.memory_space<vmem>>, vector<1x32xf32>
    %208 = arith.mulf %207, %206 : vector<1x32xf32>
    %c10_183 = arith.constant 10 : index
    %c0_184 = arith.constant 0 : index
    %209 = vector.load %arg9[%c10_183, %c0_184] : memref<16x32xf32, #tpu.memory_space<vmem>>, vector<1x32xf32>
    tpu.vector_store %arg9[%c10_183, %c0_184], %208 {strides = array<i32>} : memref<16x32xf32, #tpu.memory_space<vmem>>, vector<1x32xf32>,
    %c13 = arith.constant 13 : index
    %c0_185 = arith.constant 0 : index
    %210 = vector.load %arg4[%c13, %c0_185] : memref<16x32xf32, #tpu.memory_space<vmem>>, vector<1x32xf32>
    %211 = arith.mulf %210, %199 : vector<1x32xf32>
    %c13_186 = arith.constant 13 : index
    %c0_187 = arith.constant 0 : index
    %212 = vector.load %arg8[%c13_186, %c0_187] : memref<16x32xf32, #tpu.memory_space<vmem>>, vector<1x32xf32>
    %213 = arith.addf %211, %212 : vector<1x32xf32>
    %c13_188 = arith.constant 13 : index
    %c0_189 = arith.constant 0 : index
    %214 = vector.load %arg6[%c13_188, %c0_189] : memref<16x32xf32, #tpu.memory_space<vmem>>, vector<1x32xf32>
    %215 = arith.mulf %214, %213 : vector<1x32xf32>
    %c13_190 = arith.constant 13 : index
    %c0_191 = arith.constant 0 : index
    %216 = vector.load %arg10[%c13_190, %c0_191] : memref<16x32xf32, #tpu.memory_space<vmem>>, vector<1x32xf32>
    tpu.vector_store %arg10[%c13_190, %c0_191], %215 {strides = array<i32>} : memref<16x32xf32, #tpu.memory_space<vmem>>, vector<1x32xf32>,
    %c11 = arith.constant 11 : index
    %c0_192 = arith.constant 0 : index
    %217 = vector.load %arg3[%c11, %c0_192] : memref<16x32xf32, #tpu.memory_space<vmem>>, vector<1x32xf32>
    %218 = arith.mulf %217, %206 : vector<1x32xf32>
    %c11_193 = arith.constant 11 : index
    %c0_194 = arith.constant 0 : index
    %219 = vector.load %arg7[%c11_193, %c0_194] : memref<16x32xf32, #tpu.memory_space<vmem>>, vector<1x32xf32>
    %220 = arith.addf %218, %219 : vector<1x32xf32>
    %c11_195 = arith.constant 11 : index
    %c0_196 = arith.constant 0 : index
    %221 = vector.load %arg5[%c11_195, %c0_196] : memref<16x32xf32, #tpu.memory_space<vmem>>, vector<1x32xf32>
    %222 = arith.mulf %221, %220 : vector<1x32xf32>
    %c11_197 = arith.constant 11 : index
    %c0_198 = arith.constant 0 : index
    %223 = vector.load %arg9[%c11_197, %c0_198] : memref<16x32xf32, #tpu.memory_space<vmem>>, vector<1x32xf32>
    tpu.vector_store %arg9[%c11_197, %c0_198], %222 {strides = array<i32>} : memref<16x32xf32, #tpu.memory_space<vmem>>, vector<1x32xf32>,
    %c12 = arith.constant 12 : index
    %c0_199 = arith.constant 0 : index
    %224 = vector.load %arg4[%c12, %c0_199] : memref<16x32xf32, #tpu.memory_space<vmem>>, vector<1x32xf32>
    %225 = arith.mulf %224, %213 : vector<1x32xf32>
    %c12_200 = arith.constant 12 : index
    %c0_201 = arith.constant 0 : index
    %226 = vector.load %arg8[%c12_200, %c0_201] : memref<16x32xf32, #tpu.memory_space<vmem>>, vector<1x32xf32>
    %227 = arith.addf %225, %226 : vector<1x32xf32>
    %c12_202 = arith.constant 12 : index
    %c0_203 = arith.constant 0 : index
    %228 = vector.load %arg6[%c12_202, %c0_203] : memref<16x32xf32, #tpu.memory_space<vmem>>, vector<1x32xf32>
    %229 = arith.mulf %228, %227 : vector<1x32xf32>
    %c12_204 = arith.constant 12 : index
    %c0_205 = arith.constant 0 : index
    %230 = vector.load %arg10[%c12_204, %c0_205] : memref<16x32xf32, #tpu.memory_space<vmem>>, vector<1x32xf32>
    tpu.vector_store %arg10[%c12_204, %c0_205], %229 {strides = array<i32>} : memref<16x32xf32, #tpu.memory_space<vmem>>, vector<1x32xf32>,
    %c12_206 = arith.constant 12 : index
    %c0_207 = arith.constant 0 : index
    %231 = vector.load %arg3[%c12_206, %c0_207] : memref<16x32xf32, #tpu.memory_space<vmem>>, vector<1x32xf32>
    %232 = arith.mulf %231, %220 : vector<1x32xf32>
    %c12_208 = arith.constant 12 : index
    %c0_209 = arith.constant 0 : index
    %233 = vector.load %arg7[%c12_208, %c0_209] : memref<16x32xf32, #tpu.memory_space<vmem>>, vector<1x32xf32>
    %234 = arith.addf %232, %233 : vector<1x32xf32>
    %c12_210 = arith.constant 12 : index
    %c0_211 = arith.constant 0 : index
    %235 = vector.load %arg5[%c12_210, %c0_211] : memref<16x32xf32, #tpu.memory_space<vmem>>, vector<1x32xf32>
    %236 = arith.mulf %235, %234 : vector<1x32xf32>
    %c12_212 = arith.constant 12 : index
    %c0_213 = arith.constant 0 : index
    %237 = vector.load %arg9[%c12_212, %c0_213] : memref<16x32xf32, #tpu.memory_space<vmem>>, vector<1x32xf32>
    tpu.vector_store %arg9[%c12_212, %c0_213], %236 {strides = array<i32>} : memref<16x32xf32, #tpu.memory_space<vmem>>, vector<1x32xf32>,
    %c11_214 = arith.constant 11 : index
    %c0_215 = arith.constant 0 : index
    %238 = vector.load %arg4[%c11_214, %c0_215] : memref<16x32xf32, #tpu.memory_space<vmem>>, vector<1x32xf32>
    %239 = arith.mulf %238, %227 : vector<1x32xf32>
    %c11_216 = arith.constant 11 : index
    %c0_217 = arith.constant 0 : index
    %240 = vector.load %arg8[%c11_216, %c0_217] : memref<16x32xf32, #tpu.memory_space<vmem>>, vector<1x32xf32>
    %241 = arith.addf %239, %240 : vector<1x32xf32>
    %c11_218 = arith.constant 11 : index
    %c0_219 = arith.constant 0 : index
    %242 = vector.load %arg6[%c11_218, %c0_219] : memref<16x32xf32, #tpu.memory_space<vmem>>, vector<1x32xf32>
    %243 = arith.mulf %242, %241 : vector<1x32xf32>
    %c11_220 = arith.constant 11 : index
    %c0_221 = arith.constant 0 : index
    %244 = vector.load %arg10[%c11_220, %c0_221] : memref<16x32xf32, #tpu.memory_space<vmem>>, vector<1x32xf32>
    tpu.vector_store %arg10[%c11_220, %c0_221], %243 {strides = array<i32>} : memref<16x32xf32, #tpu.memory_space<vmem>>, vector<1x32xf32>,
    %c13_222 = arith.constant 13 : index
    %c0_223 = arith.constant 0 : index
    %245 = vector.load %arg3[%c13_222, %c0_223] : memref<16x32xf32, #tpu.memory_space<vmem>>, vector<1x32xf32>
    %246 = arith.mulf %245, %234 : vector<1x32xf32>
    %c13_224 = arith.constant 13 : index
    %c0_225 = arith.constant 0 : index
    %247 = vector.load %arg7[%c13_224, %c0_225] : memref<16x32xf32, #tpu.memory_space<vmem>>, vector<1x32xf32>
    %248 = arith.addf %246, %247 : vector<1x32xf32>
    %c13_226 = arith.constant 13 : index
    %c0_227 = arith.constant 0 : index
    %249 = vector.load %arg5[%c13_226, %c0_227] : memref<16x32xf32, #tpu.memory_space<vmem>>, vector<1x32xf32>
    %250 = arith.mulf %249, %248 : vector<1x32xf32>
    %c13_228 = arith.constant 13 : index
    %c0_229 = arith.constant 0 : index
    %251 = vector.load %arg9[%c13_228, %c0_229] : memref<16x32xf32, #tpu.memory_space<vmem>>, vector<1x32xf32>
    tpu.vector_store %arg9[%c13_228, %c0_229], %250 {strides = array<i32>} : memref<16x32xf32, #tpu.memory_space<vmem>>, vector<1x32xf32>,
    %c10_230 = arith.constant 10 : index
    %c0_231 = arith.constant 0 : index
    %252 = vector.load %arg4[%c10_230, %c0_231] : memref<16x32xf32, #tpu.memory_space<vmem>>, vector<1x32xf32>
    %253 = arith.mulf %252, %241 : vector<1x32xf32>
    %c10_232 = arith.constant 10 : index
    %c0_233 = arith.constant 0 : index
    %254 = vector.load %arg8[%c10_232, %c0_233] : memref<16x32xf32, #tpu.memory_space<vmem>>, vector<1x32xf32>
    %255 = arith.addf %253, %254 : vector<1x32xf32>
    %c10_234 = arith.constant 10 : index
    %c0_235 = arith.constant 0 : index
    %256 = vector.load %arg6[%c10_234, %c0_235] : memref<16x32xf32, #tpu.memory_space<vmem>>, vector<1x32xf32>
    %257 = arith.mulf %256, %255 : vector<1x32xf32>
    %c10_236 = arith.constant 10 : index
    %c0_237 = arith.constant 0 : index
    %258 = vector.load %arg10[%c10_236, %c0_237] : memref<16x32xf32, #tpu.memory_space<vmem>>, vector<1x32xf32>
    tpu.vector_store %arg10[%c10_236, %c0_237], %257 {strides = array<i32>} : memref<16x32xf32, #tpu.memory_space<vmem>>, vector<1x32xf32>,
    %c14_238 = arith.constant 14 : index
    %c0_239 = arith.constant 0 : index
    %259 = vector.load %arg3[%c14_238, %c0_239] : memref<16x32xf32, #tpu.memory_space<vmem>>, vector<1x32xf32>
    %260 = arith.mulf %259, %248 : vector<1x32xf32>
    %c14_240 = arith.constant 14 : index
    %c0_241 = arith.constant 0 : index
    %261 = vector.load %arg7[%c14_240, %c0_241] : memref<16x32xf32, #tpu.memory_space<vmem>>, vector<1x32xf32>
    %262 = arith.addf %260, %261 : vector<1x32xf32>
    %c14_242 = arith.constant 14 : index
    %c0_243 = arith.constant 0 : index
    %263 = vector.load %arg5[%c14_242, %c0_243] : memref<16x32xf32, #tpu.memory_space<vmem>>, vector<1x32xf32>
    %264 = arith.mulf %263, %262 : vector<1x32xf32>
    %c14_244 = arith.constant 14 : index
    %c0_245 = arith.constant 0 : index
    %265 = vector.load %arg9[%c14_244, %c0_245] : memref<16x32xf32, #tpu.memory_space<vmem>>, vector<1x32xf32>
    tpu.vector_store %arg9[%c14_244, %c0_245], %264 {strides = array<i32>} : memref<16x32xf32, #tpu.memory_space<vmem>>, vector<1x32xf32>,
    %c9_246 = arith.constant 9 : index
    %c0_247 = arith.constant 0 : index
    %266 = vector.load %arg4[%c9_246, %c0_247] : memref<16x32xf32, #tpu.memory_space<vmem>>, vector<1x32xf32>
    %267 = arith.mulf %266, %255 : vector<1x32xf32>
    %c9_248 = arith.constant 9 : index
    %c0_249 = arith.constant 0 : index
    %268 = vector.load %arg8[%c9_248, %c0_249] : memref<16x32xf32, #tpu.memory_space<vmem>>, vector<1x32xf32>
    %269 = arith.addf %267, %268 : vector<1x32xf32>
    %c9_250 = arith.constant 9 : index
    %c0_251 = arith.constant 0 : index
    %270 = vector.load %arg6[%c9_250, %c0_251] : memref<16x32xf32, #tpu.memory_space<vmem>>, vector<1x32xf32>
    %271 = arith.mulf %270, %269 : vector<1x32xf32>
    %c9_252 = arith.constant 9 : index
    %c0_253 = arith.constant 0 : index
    %272 = vector.load %arg10[%c9_252, %c0_253] : memref<16x32xf32, #tpu.memory_space<vmem>>, vector<1x32xf32>
    tpu.vector_store %arg10[%c9_252, %c0_253], %271 {strides = array<i32>} : memref<16x32xf32, #tpu.memory_space<vmem>>, vector<1x32xf32>,
    %c15_254 = arith.constant 15 : index
    %c0_255 = arith.constant 0 : index
    %273 = vector.load %arg3[%c15_254, %c0_255] : memref<16x32xf32, #tpu.memory_space<vmem>>, vector<1x32xf32>
    %274 = arith.mulf %273, %262 : vector<1x32xf32>
    %c15_256 = arith.constant 15 : index
    %c0_257 = arith.constant 0 : index
    %275 = vector.load %arg7[%c15_256, %c0_257] : memref<16x32xf32, #tpu.memory_space<vmem>>, vector<1x32xf32>
    %276 = arith.addf %274, %275 : vector<1x32xf32>
    %c15_258 = arith.constant 15 : index
    %c0_259 = arith.constant 0 : index
    %277 = vector.load %arg5[%c15_258, %c0_259] : memref<16x32xf32, #tpu.memory_space<vmem>>, vector<1x32xf32>
    %278 = arith.mulf %277, %276 : vector<1x32xf32>
    %c15_260 = arith.constant 15 : index
    %c0_261 = arith.constant 0 : index
    %279 = vector.load %arg9[%c15_260, %c0_261] : memref<16x32xf32, #tpu.memory_space<vmem>>, vector<1x32xf32>
    tpu.vector_store %arg9[%c15_260, %c0_261], %278 {strides = array<i32>} : memref<16x32xf32, #tpu.memory_space<vmem>>, vector<1x32xf32>,
    %c8_262 = arith.constant 8 : index
    %c0_263 = arith.constant 0 : index
    %280 = vector.load %arg4[%c8_262, %c0_263] : memref<16x32xf32, #tpu.memory_space<vmem>>, vector<1x32xf32>
    %281 = arith.mulf %280, %269 : vector<1x32xf32>
    %c8_264 = arith.constant 8 : index
    %c0_265 = arith.constant 0 : index
    %282 = vector.load %arg8[%c8_264, %c0_265] : memref<16x32xf32, #tpu.memory_space<vmem>>, vector<1x32xf32>
    %283 = arith.addf %281, %282 : vector<1x32xf32>
    %c8_266 = arith.constant 8 : index
    %c0_267 = arith.constant 0 : index
    %284 = vector.load %arg6[%c8_266, %c0_267] : memref<16x32xf32, #tpu.memory_space<vmem>>, vector<1x32xf32>
    %285 = arith.mulf %284, %283 : vector<1x32xf32>
    %c8_268 = arith.constant 8 : index
    %c0_269 = arith.constant 0 : index
    %286 = vector.load %arg10[%c8_268, %c0_269] : memref<16x32xf32, #tpu.memory_space<vmem>>, vector<1x32xf32>
    tpu.vector_store %arg10[%c8_268, %c0_269], %285 {strides = array<i32>} : memref<16x32xf32, #tpu.memory_space<vmem>>, vector<1x32xf32>,
    %c0_270 = arith.constant 0 : index
    %c0_271 = arith.constant 0 : index
    %287 = vector.load %arg9[%c0_270, %c0_271] : memref<16x32xf32, #tpu.memory_space<vmem>>, vector<16x32xf32>
    %c0_272 = arith.constant 0 : index
    %c0_273 = arith.constant 0 : index
    %288 = vector.load %arg10[%c0_272, %c0_273] : memref<16x32xf32, #tpu.memory_space<vmem>>, vector<16x32xf32>
    %289 = tpu.concatenate %287, %288 in 1 : vector<16x32xf32>, vector<16x32xf32> -> vector<16x64xf32>
    %cst_274 = arith.constant 0.000000e+00 : f32
    %290 = vector.broadcast %cst_274 : f32 to vector<16x64xf32>
    %291 = arith.maximumf %289, %290 : vector<16x64xf32>
    %c16 = arith.constant 16 : index
    %c0_275 = arith.constant 0 : index
    %292 = vector.load %arg1[%c16, %c0_275] : memref<96x192xf32, #tpu.memory_space<vmem>>, vector<1x64xf32>
    %293 = vector.broadcast %292 : vector<1x64xf32> to vector<16x64xf32>
    %294 = arith.mulf %291, %293 : vector<16x64xf32>
    %cst_276 = arith.constant dense<0.000000e+00> : vector<16xf32>
    %295 = vector.multi_reduction <add>, %294, %cst_276 [1] : vector<16x64xf32> to vector<16xf32>
    %296 = vector.shape_cast %295 : vector<16xf32> to vector<16x1xf32>
    %297 = vector.extract_strided_slice %296 {offsets = [0, 0], sizes = [8, 1], strides = [1, 1]} : vector<16x1xf32> to vector<8x1xf32>
    %cst_277 = arith.constant dense<0xFF800000> : vector<1xf32>
    %298 = vector.multi_reduction <maximumf>, %297, %cst_277 [0] : vector<8x1xf32> to vector<1xf32>
    %299 = vector.shape_cast %298 : vector<1xf32> to vector<1x1xf32>
    %300 = vector.broadcast %299 : vector<1x1xf32> to vector<8x1xf32>
    %301 = arith.subf %297, %300 : vector<8x1xf32>
    %302 = math.exp %301 : vector<8x1xf32>
    %cst_278 = arith.constant dense<0.000000e+00> : vector<1xf32>
    %303 = vector.multi_reduction <add>, %302, %cst_278 [0] : vector<8x1xf32> to vector<1xf32>
    %304 = vector.shape_cast %303 : vector<1xf32> to vector<1x1xf32>
    %305 = tpu.reciprocal %304 {approx = true} : vector<1x1xf32> -> vector<1x1xf32>
    %306 = vector.broadcast %305 : vector<1x1xf32> to vector<8x1xf32>
    %307 = arith.mulf %302, %306 : vector<8x1xf32>
    %308 = vector.extract_strided_slice %291 {offsets = [0, 0], sizes = [8, 64], strides = [1, 1]} : vector<16x64xf32> to vector<8x64xf32>
    %309 = vector.broadcast %307 : vector<8x1xf32> to vector<8x64xf32>
    %310 = arith.mulf %308, %309 : vector<8x64xf32>
    %cst_279 = arith.constant dense<0.000000e+00> : vector<64xf32>
    %311 = vector.multi_reduction <add>, %310, %cst_279 [0] : vector<8x64xf32> to vector<64xf32>
    %312 = vector.shape_cast %311 : vector<64xf32> to vector<1x64xf32>
    %313 = vector.extract_strided_slice %296 {offsets = [8, 0], sizes = [8, 1], strides = [1, 1]} : vector<16x1xf32> to vector<8x1xf32>
    %cst_280 = arith.constant dense<0xFF800000> : vector<1xf32>
    %314 = vector.multi_reduction <maximumf>, %313, %cst_280 [0] : vector<8x1xf32> to vector<1xf32>
    %315 = vector.shape_cast %314 : vector<1xf32> to vector<1x1xf32>
    %316 = vector.broadcast %315 : vector<1x1xf32> to vector<8x1xf32>
    %317 = arith.subf %313, %316 : vector<8x1xf32>
    %318 = math.exp %317 : vector<8x1xf32>
    %cst_281 = arith.constant dense<0.000000e+00> : vector<1xf32>
    %319 = vector.multi_reduction <add>, %318, %cst_281 [0] : vector<8x1xf32> to vector<1xf32>
    %320 = vector.shape_cast %319 : vector<1xf32> to vector<1x1xf32>
    %321 = tpu.reciprocal %320 {approx = true} : vector<1x1xf32> -> vector<1x1xf32>
    %322 = vector.broadcast %321 : vector<1x1xf32> to vector<8x1xf32>
    %323 = arith.mulf %318, %322 : vector<8x1xf32>
    %324 = vector.extract_strided_slice %291 {offsets = [8, 0], sizes = [8, 64], strides = [1, 1]} : vector<16x64xf32> to vector<8x64xf32>
    %325 = vector.broadcast %323 : vector<8x1xf32> to vector<8x64xf32>
    %326 = arith.mulf %324, %325 : vector<8x64xf32>
    %cst_282 = arith.constant dense<0.000000e+00> : vector<64xf32>
    %327 = vector.multi_reduction <add>, %326, %cst_282 [0] : vector<8x64xf32> to vector<64xf32>
    %328 = vector.shape_cast %327 : vector<64xf32> to vector<1x64xf32>
    %329 = tpu.concatenate %312, %328 in 0 : vector<1x64xf32>, vector<1x64xf32> -> vector<2x64xf32>
    %cst_283 = arith.constant 0.000000e+00 : f32
    %330 = vector.broadcast %cst_283 : f32 to vector<2x64xf32>
    %331 = arith.maximumf %329, %330 : vector<2x64xf32>
    %c24 = arith.constant 24 : index
    %c0_284 = arith.constant 0 : index
    %332 = vector.load %arg1[%c24, %c0_284] : memref<96x192xf32, #tpu.memory_space<vmem>>, vector<64x5xf32>
    %c88 = arith.constant 88 : index
    %c0_285 = arith.constant 0 : index
    %333 = vector.load %arg1[%c88, %c0_285] : memref<96x192xf32, #tpu.memory_space<vmem>>, vector<1x5xf32>
    %cst_286 = arith.constant dense<0.000000e+00> : vector<2x5xf32>
    %334 = tpu.matmul %331, %332, %cst_286 {dimension_numbers = #tpu.dot_dimension_numbers<[1], [0], [0], [1], [0, 0, 1, 1], [], []>} : vector<2x64xf32>, vector<64x5xf32>, vector<2x5xf32> -> vector<2x5xf32>
    %335 = vector.broadcast %333 : vector<1x5xf32> to vector<2x5xf32>
    %336 = arith.addf %334, %335 : vector<2x5xf32>
    %c0_287 = arith.constant 0 : index
    %c0_288 = arith.constant 0 : index
    %337 = vector.load %arg2[%c0_287, %c0_288] : memref<2x5xf32, #tpu.memory_space<vmem>>, vector<2x5xf32>
    tpu.vector_store %arg2[%c0_287, %c0_288], %336 {strides = array<i32>} : memref<2x5xf32, #tpu.memory_space<vmem>>, vector<2x5xf32>,
    return
  }
}

</mosaic_0001>

<llo_original>
// kernel: tpu_custom_call.1
$region0: #{tpu_custom_call.1}
  #allocation0 [shape = 'u32[]', space=smem, size = 0x4, offset = 0x4, fixed_abs, tag = 'smem constant byte address 0x4 - core index']
  #allocation1 [shape = 'u32[72,128]{1,0:T(1,128)}', space=vmem, size = 0x9000, scoped, tag = 'internal scratch']
  #allocation2 [shape = 'f32[16,32]{1,0:T(8,128)}', space=vmem, size = 0x2000, scoped, tag = 'scratch operand']
  #allocation3 [shape = 'f32[16,32]{1,0:T(8,128)}', space=vmem, size = 0x2000, scoped, tag = 'scratch operand']
  #allocation4 [shape = 'f32[16,32]{1,0:T(8,128)}', space=vmem, size = 0x2000, scoped, tag = 'scratch operand']
  #allocation5 [shape = 'f32[16,32]{1,0:T(8,128)}', space=vmem, size = 0x2000, scoped, tag = 'scratch operand']
  #allocation6 [shape = 'f32[16,32]{1,0:T(8,128)}', space=vmem, size = 0x2000, scoped, tag = 'scratch operand']
  #allocation7 [shape = 'f32[16,32]{1,0:T(8,128)}', space=vmem, size = 0x2000, scoped, tag = 'scratch operand']
  #allocation8 [shape = 'f32[16,32]{1,0:T(8,128)}', space=vmem, size = 0x2000, scoped, tag = 'scratch operand']
  #allocation9 [shape = 'f32[16,32]{1,0:T(8,128)}', space=vmem, size = 0x2000, scoped, tag = 'scratch operand']
  %s0 = inlined_call_operand.vmem [shape: f32[16,3], index: 0, kind: input, shape index: {}]
  %s1 = inlined_call_operand.hbm [shape: f32[96,192], index: 1, kind: input, shape index: {}]
  %s2 = inlined_call_operand.hbm [shape: f32[2,5], index: 2, kind: output, shape index: {}]
  %s3 = sld [smem:[#allocation0]]
  $region22: #{tpu_custom_call.1} parent=0
    _
  %s5 = ssub.s32 1, %s3
  %s6 = scalar_select 0, %s5, %s3
  $region1: #{tpu_custom_call.1} parent=0
    #allocation10 [shape = 'u8[98304]{0}', space=vmem, size = 0x18000, scoped, tag = 'input window, operand 1, single buffered']
    #allocation11 [shape = 's32[1]{0}', space=sflag, size = 0x4, scoped, tag = 'scoped memory for tpu_custom_call.1']
    #allocation12 [shape = 's32[1]{0}', space=sflag, size = 0x4, scoped, tag = 'scoped memory for tpu_custom_call.1']
    #allocation13 [shape = 'u8[1024]{0}', space=vmem, size = 0x400, scoped, tag = 'output window, operand 0, single buffered']
    %7 = vsyncpa [#allocation11], 0
    %8 = vsyncpa [#allocation12], 0
    // Predicated region
    $region2: #{tpu_custom_call.1} parent=1 // pred_check
      _
    $region3: #{tpu_custom_call.1} parent=1 // pred_check_branch
      %10 = sbr.rel (0) target = $region5
    $region4: #{tpu_custom_call.1} parent=1 // pred_region
      _
    $region5: #{tpu_custom_call.1} parent=1 // pred_fallthru
      _
    // Predicated region
    $region6: #{tpu_custom_call.1} parent=1 // pred_check
      _
    $region7: #{tpu_custom_call.1} parent=1 // pred_check_branch
      %12 = sbr.rel (0) target = $region9
    $region8: #{tpu_custom_call.1} parent=1 // pred_region
      %14 = vsyncadd [#allocation11], 0
      %s15 = sshll.u32 %s1, 4
      %s16 = int_to_ptr.hbm [resolvable:$true] %s15
      %s17 = sshll.u32 [#allocation10], 4
      %s18 = int_to_ptr.vmem [resolvable:$true] %s17
      %23 = dma.hbm_to_vmem [thread:$0]  %s16, 3072, %s18, [#allocation11], 256, 256, 16
    $region9: #{tpu_custom_call.1} parent=1 // pred_fallthru
      _
    // Predicated region
    $region10: #{tpu_custom_call.1} parent=1 // pred_check
      _
    $region11: #{tpu_custom_call.1} parent=1 // pred_check_branch
      %25 = sbr.rel (0) target = $region13
    $region12: #{tpu_custom_call.1} parent=1 // pred_region
      %27 = dma.done [#allocation11], 3072
    $region13: #{tpu_custom_call.1} parent=1 // pred_fallthru
      _
    %v28 = vlaneseq
    %v29 = vand.u32 %v28, 127
    %v30 = vld [vmem:[%s0] sm:$0xff]
    %v31 = vld [vmem:[%s0 + $0x8] sm:$0xff]
    %v32 = vcvt.f32.s32.to.zero.pseudo %v30
    %v33 = vcvt.f32.s32.to.zero.pseudo %v31
    %vm34 = vcmp.eq.s32.totalorder %v29, 0
    %36 = vset.pattern.permute.xlu0 0
    %37 = vperm.xlu0 %36, %v30
    %v38 = vpop.permute.xlu0 %37
    %41 = vset.pattern.permute.xlu0 0
    %42 = vperm.xlu0 %41, %v31
    %v43 = vpop.permute.xlu0 %42
    %v45 = vsel %vm34, %v38, 0.0
    %v46 = vsel %vm34, %v43, 0.0
    %vm47 = vcmp.eq.s32.totalorder %v29, 1
    %48 = vset.pattern.permute.xlu0 1
    %49 = vperm.xlu0 %48, %v30
    %v50 = vpop.permute.xlu0 %49
    %52 = vset.pattern.permute.xlu0 1
    %53 = vperm.xlu0 %52, %v31
    %v54 = vpop.permute.xlu0 %53
    %v56 = vsel %vm47, %v50, 0.0
    %v57 = vsel %vm47, %v54, 0.0
    %v58 = vadd.f32 %v45, %v56
    %v59 = vadd.f32 %v46, %v57
    %v60 = vadd.s32 %v32, 2
    %v61 = vadd.s32 %v33, 2
    %62 = vset.pattern.permute.xlu0 2
    %63 = vperm.xlu0 %62, %v60
    %v64 = vpop.permute.xlu0 %63
    %65 = vset.pattern.permute.xlu0 2
    %66 = vperm.xlu0 %65, %v61
    %v67 = vpop.permute.xlu0 %66
    %vm68 = vcmp.eq.s32.totalorder %v29, %v64
    %vm69 = vcmp.eq.s32.totalorder %v29, %v67
    %v70 = vsel %vm68, 1, 0
    %v71 = vsel %vm69, 1, 0
    %v72 = vcvt.s32.f32 %v70
    %v73 = vcvt.s32.f32 %v71
    %v74 = vadd.f32 %v58, %v72
    %v75 = vadd.f32 %v59, %v73
    %vm76 = vcmp.eq.s32.totalorder %v29, 12
    %v77 = vsel %vm76, 1, 0
    %v78 = vcvt.s32.f32 %v77
    %v79 = vadd.f32 %v74, %v78
    %v80 = vadd.f32 %v75, %v78
    %v81 = vld [vmem:[#allocation10] sm:$0xff]
    %v82 = vld [vmem:[#allocation10 + $0x8] sm:$0xff]
    %v83 = vld [vmem:[#allocation10 + $0x10] sm:$0xff]
    %v84 = vld [vmem:[#allocation10 + $0x18] sm:$0xff]
    %vm85 = vcmask 130048
    %v87 = vsel %vm85, %v79, 0
    %v90 = vsel %vm85, %v80, 0
    %92 = vmatpush.msra.mxu0 0.0
    %93 = vmatpush.msra.mxu0 0.0
    %94 = vmatpush.msra.mxu0 0.0
    %95 = vmatpush.msra.mxu0 0.0
    %96 = vmatpush.msra.mxu0 0.0
    %97 = vmatpush.msra.mxu0 0.0
    %98 = vmatpush.msra.mxu0 0.0
    %99 = vmatpush.msra.mxu0 0.0
    %100 = vmatpush.msra.mxu0 0.0
    %101 = vmatpush.msra.mxu0 0.0
    %102 = vmatpush.msra.mxu0 0.0
    %103 = vmatpush.msra.mxu0 0.0
    %104 = vmatpush.msra.mxu0 0.0
    %105 = vmatpush.msra.mxu0 0.0
    %106 = vmatpush.msra.mxu0 %v83
    %107 = vmatpush.msra.mxu0 %v81
    %108 = vmatmul.f32.gmra.mxu0 %v87
    %v109 = vpop.f32.mrf.mxu0
    %v110 = vadd.f32 0.0, %v109
    %111 = vmatmul.f32.gmra.mxu0 %v90
    %v112 = vpop.f32.mrf.mxu0
    %v113 = vadd.f32 0.0, %v112
    %114 = vdwg.mxu0
    %115 = vmatpush.msra.mxu0 0.0
    %116 = vmatpush.msra.mxu0 0.0
    %117 = vmatpush.msra.mxu0 0.0
    %118 = vmatpush.msra.mxu0 0.0
    %119 = vmatpush.msra.mxu0 0.0
    %120 = vmatpush.msra.mxu0 0.0
    %121 = vmatpush.msra.mxu0 0.0
    %122 = vmatpush.msra.mxu0 0.0
    %123 = vmatpush.msra.mxu0 0.0
    %124 = vmatpush.msra.mxu0 0.0
    %125 = vmatpush.msra.mxu0 0.0
    %126 = vmatpush.msra.mxu0 0.0
    %127 = vmatpush.msra.mxu0 0.0
    %128 = vmatpush.msra.mxu0 0.0
    %129 = vmatpush.msra.mxu0 %v84
    %130 = vmatpush.msra.mxu0 %v82
    %131 = vmatmul.f32.gmra.mxu0 %v87
    %v132 = vpop.f32.mrf.mxu0
    %v133 = vadd.f32 0.0, %v132
    %134 = vmatmul.f32.gmra.mxu0 %v90
    %v135 = vpop.f32.mrf.mxu0
    %v136 = vadd.f32 0.0, %v135
    %137 = vdwg.mxu0
    %v138 = vsub.f32 0.0, %v110
    %v139 = vsub.f32 0.0, %v113
    %v140 = vmul.f32 %v138, 1.442695
    %v141 = vpow.pop %v140
    %v142 = vmul.f32 %v139, 1.442695
    %v143 = vpow.pop %v142
    %v144 = vadd.f32 %v141, 1.0
    %v145 = vadd.f32 %v143, 1.0
    %v146 = vrcp.pop %v144
    %v147 = vmul.f32 %v144, %v146
    %v148 = vsub.f32 1.0, %v147
    %v149 = vmul.f32 %v146, %v148
    %v150 = vadd.f32 %v146, %v149
    %vm151 = vweird.f32 %v144
    %vm152 = vweird.f32 %v146
    %vm153 = vmor %vm151, %vm152
    %v154 = vsel %vm153, %v146, %v150
    %v155 = vand.u32 2147483647, %v144
    %vm156 = vcmp.eq.f32.partialorder %v155, 8.507059e+37
    %v157 = vand.u32 %v144, 2147483648
    %v158 = vor.u32 1.1754944e-38, %v157
    %v159 = vsel %vm156, %v158, %v154
    %v160 = vmul.f32 1.0, %v159
    %v161 = vrcp.pop %v145
    %v162 = vmul.f32 %v145, %v161
    %v163 = vsub.f32 1.0, %v162
    %v164 = vmul.f32 %v161, %v163
    %v165 = vadd.f32 %v161, %v164
    %vm166 = vweird.f32 %v145
    %vm167 = vweird.f32 %v161
    %vm168 = vmor %vm166, %vm167
    %v169 = vsel %vm168, %v161, %v165
    %v170 = vand.u32 2147483647, %v145
    %vm171 = vcmp.eq.f32.partialorder %v170, 8.507059e+37
    %v172 = vand.u32 %v145, 2147483648
    %v173 = vor.u32 1.1754944e-38, %v172
    %v174 = vsel %vm171, %v173, %v169
    %v175 = vmul.f32 1.0, %v174
    %v176 = vtanh.pop %v133
    %v177 = vtanh.pop %v136
    %v178 = vsub.f32 1.0, %v160
    %v179 = vsub.f32 1.0, %v175
    %v180 = vmul.f32 %v178, %v176
    %v181 = vmul.f32 %v179, %v177
    %vm182 = vcmask 261120
    %183 = vst.msk [vmem:[#allocation2] sm:$0xff] %vm182, %v160
    %184 = vst.msk [vmem:[#allocation2 + $0x8] sm:$0xff] %vm182, %v175
    %187 = vrot.lane.b32.xlu0 %v160, 96
    %v188 = vpop.permute.xlu0 %187
    %189 = vrot.lane.b32.xlu0 %v175, 96
    %v190 = vpop.permute.xlu0 %189
    %193 = vst.msk [vmem:[#allocation3] sm:$0xff] %vm182, %v188
    %194 = vst.msk [vmem:[#allocation3 + $0x8] sm:$0xff] %vm182, %v190
    %195 = vrot.lane.b32.xlu0 %v160, 64
    %v196 = vpop.permute.xlu0 %195
    %197 = vrot.lane.b32.xlu0 %v175, 64
    %v198 = vpop.permute.xlu0 %197
    %201 = vst.msk [vmem:[#allocation4] sm:$0xff] %vm182, %v196
    %202 = vst.msk [vmem:[#allocation4 + $0x8] sm:$0xff] %vm182, %v198
    %203 = vrot.lane.b32.xlu0 %v160, 32
    %v204 = vpop.permute.xlu0 %203
    %205 = vrot.lane.b32.xlu0 %v175, 32
    %v206 = vpop.permute.xlu0 %205
    %209 = vst.msk [vmem:[#allocation5] sm:$0xff] %vm182, %v204
    %210 = vst.msk [vmem:[#allocation5 + $0x8] sm:$0xff] %vm182, %v206
    %211 = vst.msk [vmem:[#allocation6] sm:$0xff] %vm182, %v180
    %212 = vst.msk [vmem:[#allocation6 + $0x8] sm:$0xff] %vm182, %v181
    %215 = vrot.lane.b32.xlu0 %v180, 96
    %v216 = vpop.permute.xlu0 %215
    %217 = vrot.lane.b32.xlu0 %v181, 96
    %v218 = vpop.permute.xlu0 %217
    %221 = vst.msk [vmem:[#allocation7] sm:$0xff] %vm182, %v216
    %222 = vst.msk [vmem:[#allocation7 + $0x8] sm:$0xff] %vm182, %v218
    %v223 = vld [vmem:[#allocation2] sm:$0x1]
    %v224 = vmul.f32 %v223, 0.0
    %v225 = vld [vmem:[#allocation6] sm:$0x1]
    %v226 = vadd.f32 %v224, %v225
    %v227 = vld [vmem:[#allocation4] sm:$0x1]
    %v228 = vmul.f32 %v227, %v226
    %vm229 = vcmask 253952
    %230 = vst.msk [vmem:[#allocation8] sm:$0x1] %vm229, %v228
    %v231 = vld [vmem:[#allocation3 + $0x7] sm:$0x1]
    %v232 = vmul.f32 %v231, 0.0
    %v233 = vld [vmem:[#allocation7 + $0x7] sm:$0x1]
    %v234 = vadd.f32 %v232, %v233
    %v235 = vld [vmem:[#allocation5 + $0x7] sm:$0x1]
    %v236 = vmul.f32 %v235, %v234
    %237 = vst.msk [vmem:[#allocation9 + $0x7] sm:$0x1] %vm229, %v236
    %v238 = vld [vmem:[#allocation2 + $0x1] sm:$0x1]
    %v239 = vmul.f32 %v238, %v226
    %v240 = vld [vmem:[#allocation6 + $0x1] sm:$0x1]
    %v241 = vadd.f32 %v239, %v240
    %v242 = vld [vmem:[#allocation4 + $0x1] sm:$0x1]
    %v243 = vmul.f32 %v242, %v241
    %244 = vst.msk [vmem:[#allocation8 + $0x1] sm:$0x1] %vm229, %v243
    %v245 = vld [vmem:[#allocation3 + $0x6] sm:$0x1]
    %v246 = vmul.f32 %v245, %v234
    %v247 = vld [vmem:[#allocation7 + $0x6] sm:$0x1]
    %v248 = vadd.f32 %v246, %v247
    %v249 = vld [vmem:[#allocation5 + $0x6] sm:$0x1]
    %v250 = vmul.f32 %v249, %v248
    %251 = vst.msk [vmem:[#allocation9 + $0x6] sm:$0x1] %vm229, %v250
    %v252 = vld [vmem:[#allocation2 + $0x2] sm:$0x1]
    %v253 = vmul.f32 %v252, %v241
    %v254 = vld [vmem:[#allocation6 + $0x2] sm:$0x1]
    %v255 = vadd.f32 %v253, %v254
    %v256 = vld [vmem:[#allocation4 + $0x2] sm:$0x1]
    %v257 = vmul.f32 %v256, %v255
    %258 = vst.msk [vmem:[#allocation8 + $0x2] sm:$0x1] %vm229, %v257
    %v259 = vld [vmem:[#allocation3 + $0x5] sm:$0x1]
    %v260 = vmul.f32 %v259, %v248
    %v261 = vld [vmem:[#allocation7 + $0x5] sm:$0x1]
    %v262 = vadd.f32 %v260, %v261
    %v263 = vld [vmem:[#allocation5 + $0x5] sm:$0x1]
    %v264 = vmul.f32 %v263, %v262
    %265 = vst.msk [vmem:[#allocation9 + $0x5] sm:$0x1] %vm229, %v264
    %v266 = vld [vmem:[#allocation2 + $0x3] sm:$0x1]
    %v267 = vmul.f32 %v266, %v255
    %v268 = vld [vmem:[#allocation6 + $0x3] sm:$0x1]
    %v269 = vadd.f32 %v267, %v268
    %v270 = vld [vmem:[#allocation4 + $0x3] sm:$0x1]
    %v271 = vmul.f32 %v270, %v269
    %272 = vst.msk [vmem:[#allocation8 + $0x3] sm:$0x1] %vm229, %v271
    %v273 = vld [vmem:[#allocation3 + $0x4] sm:$0x1]
    %v274 = vmul.f32 %v273, %v262
    %v275 = vld [vmem:[#allocation7 + $0x4] sm:$0x1]
    %v276 = vadd.f32 %v274, %v275
    %v277 = vld [vmem:[#allocation5 + $0x4] sm:$0x1]
    %v278 = vmul.f32 %v277, %v276
    %279 = vst.msk [vmem:[#allocation9 + $0x4] sm:$0x1] %vm229, %v278
    %v280 = vld [vmem:[#allocation2 + $0x4] sm:$0x1]
    %v281 = vmul.f32 %v280, %v269
    %v282 = vld [vmem:[#allocation6 + $0x4] sm:$0x1]
    %v283 = vadd.f32 %v281, %v282
    %v284 = vld [vmem:[#allocation4 + $0x4] sm:$0x1]
    %v285 = vmul.f32 %v284, %v283
    %286 = vst.msk [vmem:[#allocation8 + $0x4] sm:$0x1] %vm229, %v285
    %v287 = vld [vmem:[#allocation3 + $0x3] sm:$0x1]
    %v288 = vmul.f32 %v287, %v276
    %v289 = vld [vmem:[#allocation7 + $0x3] sm:$0x1]
    %v290 = vadd.f32 %v288, %v289
    %v291 = vld [vmem:[#allocation5 + $0x3] sm:$0x1]
    %v292 = vmul.f32 %v291, %v290
    %293 = vst.msk [vmem:[#allocation9 + $0x3] sm:$0x1] %vm229, %v292
    %v294 = vld [vmem:[#allocation2 + $0x5] sm:$0x1]
    %v295 = vmul.f32 %v294, %v283
    %v296 = vld [vmem:[#allocation6 + $0x5] sm:$0x1]
    %v297 = vadd.f32 %v295, %v296
    %v298 = vld [vmem:[#allocation4 + $0x5] sm:$0x1]
    %v299 = vmul.f32 %v298, %v297
    %300 = vst.msk [vmem:[#allocation8 + $0x5] sm:$0x1] %vm229, %v299
    %v301 = vld [vmem:[#allocation3 + $0x2] sm:$0x1]
    %v302 = vmul.f32 %v301, %v290
    %v303 = vld [vmem:[#allocation7 + $0x2] sm:$0x1]
    %v304 = vadd.f32 %v302, %v303
    %v305 = vld [vmem:[#allocation5 + $0x2] sm:$0x1]
    %v306 = vmul.f32 %v305, %v304
    %307 = vst.msk [vmem:[#allocation9 + $0x2] sm:$0x1] %vm229, %v306
    %v308 = vld [vmem:[#allocation2 + $0x6] sm:$0x1]
    %v309 = vmul.f32 %v308, %v297
    %v310 = vld [vmem:[#allocation6 + $0x6] sm:$0x1]
    %v311 = vadd.f32 %v309, %v310
    %v312 = vld [vmem:[#allocation4 + $0x6] sm:$0x1]
    %v313 = vmul.f32 %v312, %v311
    %314 = vst.msk [vmem:[#allocation8 + $0x6] sm:$0x1] %vm229, %v313
    %v315 = vld [vmem:[#allocation3 + $0x1] sm:$0x1]
    %v316 = vmul.f32 %v315, %v304
    %v317 = vld [vmem:[#allocation7 + $0x1] sm:$0x1]
    %v318 = vadd.f32 %v316, %v317
    %v319 = vld [vmem:[#allocation5 + $0x1] sm:$0x1]
    %v320 = vmul.f32 %v319, %v318
    %321 = vst.msk [vmem:[#allocation9 + $0x1] sm:$0x1] %vm229, %v320
    %v322 = vld [vmem:[#allocation2 + $0x7] sm:$0x1]
    %v323 = vmul.f32 %v322, %v311
    %v324 = vld [vmem:[#allocation6 + $0x7] sm:$0x1]
    %v325 = vadd.f32 %v323, %v324
    %v326 = vld [vmem:[#allocation4 + $0x7] sm:$0x1]
    %v327 = vmul.f32 %v326, %v325
    %328 = vst.msk [vmem:[#allocation8 + $0x7] sm:$0x1] %vm229, %v327
    %v329 = vld [vmem:[#allocation3] sm:$0x1]
    %v330 = vmul.f32 %v329, %v318
    %v331 = vld [vmem:[#allocation7] sm:$0x1]
    %v332 = vadd.f32 %v330, %v331
    %v333 = vld [vmem:[#allocation5] sm:$0x1]
    %v334 = vmul.f32 %v333, %v332
    %335 = vst.msk [vmem:[#allocation9] sm:$0x1] %vm229, %v334
    %v336 = vld [vmem:[#allocation2 + $0x8] sm:$0x1]
    %v337 = vmul.f32 %v336, 0.0
    %v338 = vld [vmem:[#allocation6 + $0x8] sm:$0x1]
    %v339 = vadd.f32 %v337, %v338
    %v340 = vld [vmem:[#allocation4 + $0x8] sm:$0x1]
    %v341 = vmul.f32 %v340, %v339
    %342 = vst.msk [vmem:[#allocation8 + $0x8] sm:$0x1] %vm229, %v341
    %v343 = vld [vmem:[#allocation3 + $0xf] sm:$0x1]
    %v344 = vmul.f32 %v343, 0.0
    %v345 = vld [vmem:[#allocation7 + $0xf] sm:$0x1]
    %v346 = vadd.f32 %v344, %v345
    %v347 = vld [vmem:[#allocation5 + $0xf] sm:$0x1]
    %v348 = vmul.f32 %v347, %v346
    %349 = vst.msk [vmem:[#allocation9 + $0xf] sm:$0x1] %vm229, %v348
    %v350 = vld [vmem:[#allocation2 + $0x9] sm:$0x1]
    %v351 = vmul.f32 %v350, %v339
    %v352 = vld [vmem:[#allocation6 + $0x9] sm:$0x1]
    %v353 = vadd.f32 %v351, %v352
    %v354 = vld [vmem:[#allocation4 + $0x9] sm:$0x1]
    %v355 = vmul.f32 %v354, %v353
    %356 = vst.msk [vmem:[#allocation8 + $0x9] sm:$0x1] %vm229, %v355
    %v357 = vld [vmem:[#allocation3 + $0xe] sm:$0x1]
    %v358 = vmul.f32 %v357, %v346
    %v359 = vld [vmem:[#allocation7 + $0xe] sm:$0x1]
    %v360 = vadd.f32 %v358, %v359
    %v361 = vld [vmem:[#allocation5 + $0xe] sm:$0x1]
    %v362 = vmul.f32 %v361, %v360
    %363 = vst.msk [vmem:[#allocation9 + $0xe] sm:$0x1] %vm229, %v362
    %v364 = vld [vmem:[#allocation2 + $0xa] sm:$0x1]
    %v365 = vmul.f32 %v364, %v353
    %v366 = vld [vmem:[#allocation6 + $0xa] sm:$0x1]
    %v367 = vadd.f32 %v365, %v366
    %v368 = vld [vmem:[#allocation4 + $0xa] sm:$0x1]
    %v369 = vmul.f32 %v368, %v367
    %370 = vst.msk [vmem:[#allocation8 + $0xa] sm:$0x1] %vm229, %v369
    %v371 = vld [vmem:[#allocation3 + $0xd] sm:$0x1]
    %v372 = vmul.f32 %v371, %v360
    %v373 = vld [vmem:[#allocation7 + $0xd] sm:$0x1]
    %v374 = vadd.f32 %v372, %v373
    %v375 = vld [vmem:[#allocation5 + $0xd] sm:$0x1]
    %v376 = vmul.f32 %v375, %v374
    %377 = vst.msk [vmem:[#allocation9 + $0xd] sm:$0x1] %vm229, %v376
    %v378 = vld [vmem:[#allocation2 + $0xb] sm:$0x1]
    %v379 = vmul.f32 %v378, %v367
    %v380 = vld [vmem:[#allocation6 + $0xb] sm:$0x1]
    %v381 = vadd.f32 %v379, %v380
    %v382 = vld [vmem:[#allocation4 + $0xb] sm:$0x1]
    %v383 = vmul.f32 %v382, %v381
    %384 = vst.msk [vmem:[#allocation8 + $0xb] sm:$0x1] %vm229, %v383
    %v385 = vld [vmem:[#allocation3 + $0xc] sm:$0x1]
    %v386 = vmul.f32 %v385, %v374
    %v387 = vld [vmem:[#allocation7 + $0xc] sm:$0x1]
    %v388 = vadd.f32 %v386, %v387
    %v389 = vld [vmem:[#allocation5 + $0xc] sm:$0x1]
    %v390 = vmul.f32 %v389, %v388
    %391 = vst.msk [vmem:[#allocation9 + $0xc] sm:$0x1] %vm229, %v390
    %v392 = vld [vmem:[#allocation2 + $0xc] sm:$0x1]
    %v393 = vmul.f32 %v392, %v381
    %v394 = vld [vmem:[#allocation6 + $0xc] sm:$0x1]
    %v395 = vadd.f32 %v393, %v394
    %v396 = vld [vmem:[#allocation4 + $0xc] sm:$0x1]
    %v397 = vmul.f32 %v396, %v395
    %398 = vst.msk [vmem:[#allocation8 + $0xc] sm:$0x1] %vm229, %v397
    %v399 = vld [vmem:[#allocation3 + $0xb] sm:$0x1]
    %v400 = vmul.f32 %v399, %v388
    %v401 = vld [vmem:[#allocation7 + $0xb] sm:$0x1]
    %v402 = vadd.f32 %v400, %v401
    %v403 = vld [vmem:[#allocation5 + $0xb] sm:$0x1]
    %v404 = vmul.f32 %v403, %v402
    %405 = vst.msk [vmem:[#allocation9 + $0xb] sm:$0x1] %vm229, %v404
    %v406 = vld [vmem:[#allocation2 + $0xd] sm:$0x1]
    %v407 = vmul.f32 %v406, %v395
    %v408 = vld [vmem:[#allocation6 + $0xd] sm:$0x1]
    %v409 = vadd.f32 %v407, %v408
    %v410 = vld [vmem:[#allocation4 + $0xd] sm:$0x1]
    %v411 = vmul.f32 %v410, %v409
    %412 = vst.msk [vmem:[#allocation8 + $0xd] sm:$0x1] %vm229, %v411
    %v413 = vld [vmem:[#allocation3 + $0xa] sm:$0x1]
    %v414 = vmul.f32 %v413, %v402
    %v415 = vld [vmem:[#allocation7 + $0xa] sm:$0x1]
    %v416 = vadd.f32 %v414, %v415
    %v417 = vld [vmem:[#allocation5 + $0xa] sm:$0x1]
    %v418 = vmul.f32 %v417, %v416
    %419 = vst.msk [vmem:[#allocation9 + $0xa] sm:$0x1] %vm229, %v418
    %v420 = vld [vmem:[#allocation2 + $0xe] sm:$0x1]
    %v421 = vmul.f32 %v420, %v409
    %v422 = vld [vmem:[#allocation6 + $0xe] sm:$0x1]
    %v423 = vadd.f32 %v421, %v422
    %v424 = vld [vmem:[#allocation4 + $0xe] sm:$0x1]
    %v425 = vmul.f32 %v424, %v423
    %426 = vst.msk [vmem:[#allocation8 + $0xe] sm:$0x1] %vm229, %v425
    %v427 = vld [vmem:[#allocation3 + $0x9] sm:$0x1]
    %v428 = vmul.f32 %v427, %v416
    %v429 = vld [vmem:[#allocation7 + $0x9] sm:$0x1]
    %v430 = vadd.f32 %v428, %v429
    %v431 = vld [vmem:[#allocation5 + $0x9] sm:$0x1]
    %v432 = vmul.f32 %v431, %v430
    %433 = vst.msk [vmem:[#allocation9 + $0x9] sm:$0x1] %vm229, %v432
    %v434 = vld [vmem:[#allocation2 + $0xf] sm:$0x1]
    %v435 = vmul.f32 %v434, %v423
    %v436 = vld [vmem:[#allocation6 + $0xf] sm:$0x1]
    %v437 = vadd.f32 %v435, %v436
    %v438 = vld [vmem:[#allocation4 + $0xf] sm:$0x1]
    %v439 = vmul.f32 %v438, %v437
    %440 = vst.msk [vmem:[#allocation8 + $0xf] sm:$0x1] %vm229, %v439
    %v441 = vld [vmem:[#allocation3 + $0x8] sm:$0x1]
    %v442 = vmul.f32 %v441, %v430
    %v443 = vld [vmem:[#allocation7 + $0x8] sm:$0x1]
    %v444 = vadd.f32 %v442, %v443
    %v445 = vld [vmem:[#allocation5 + $0x8] sm:$0x1]
    %v446 = vmul.f32 %v445, %v444
    %447 = vst.msk [vmem:[#allocation9 + $0x8] sm:$0x1] %vm229, %v446
    %v448 = vld [vmem:[#allocation8] sm:$0xff]
    %v449 = vld [vmem:[#allocation8 + $0x8] sm:$0xff]
    %v450 = vld [vmem:[#allocation9] sm:$0xff]
    %v451 = vld [vmem:[#allocation9 + $0x8] sm:$0xff]
    %454 = vrot.lane.b32.xlu0 %v450, 32
    %v455 = vpop.permute.xlu0 %454
    %456 = vrot.lane.b32.xlu0 %v451, 32
    %v457 = vpop.permute.xlu0 %456
    %v460 = vsel %vm182, %v448, %v455
    %v461 = vsel %vm182, %v449, %v457
    %v462 = vmax.f32 %v460, 0.0
    %v463 = vmax.f32 %v461, 0.0
    %v464 = vld [vmem:[#allocation10 + $0x20] ss:$0 sm:$0xff]
    %v465 = vmul.f32 %v462, %v464
    %v466 = vmul.f32 %v463, %v464
    %vm467 = vcmask 523264
    %v468 = vsel %vm467, %v465, 0.0
    %469 = vadd.xlane.f32.xlu0 %v468
    %v470 = vpop.xlane.xlu0 %469
    %v471 = vsel %vm467, %v466, 0.0
    %472 = vadd.xlane.f32.xlu0 %v471
    %v473 = vpop.xlane.xlu0 %472
    %v474 = vrot.slane %v470, 4
    %v475 = vmax.f32 %v470, %v474
    %v476 = vrot.slane %v475, 2
    %v477 = vmax.f32 %v475, %v476
    %v478 = vrot.slane %v477, 1
    %v479 = vmax.f32 %v477, %v478
    %v480 = vsub.f32 %v470, %v479
    %v481 = vmul.f32 %v480, 1.442695
    %v482 = vpow.pop %v481
    %v483 = vrot.slane %v482, 4
    %v484 = vadd.f32 %v482, %v483
    %v485 = vrot.slane %v484, 2
    %v486 = vadd.f32 %v484, %v485
    %v487 = vrot.slane %v486, 1
    %v488 = vadd.f32 %v486, %v487
    %v489 = vrcp.pop %v488
    %v490 = vmul.f32 %v482, %v489
    %v491 = vmul.f32 %v462, %v490
    %v492 = vsel %vm467, %v491, 0.0
    %v493 = vrot.slane %v492, 4
    %v494 = vadd.f32 %v492, %v493
    %v495 = vrot.slane %v494, 2
    %v496 = vadd.f32 %v494, %v495
    %v497 = vrot.slane %v496, 1
    %v498 = vadd.f32 %v496, %v497
    %v499 = vrot.slane %v473, 4
    %v500 = vmax.f32 %v473, %v499
    %v501 = vrot.slane %v500, 2
    %v502 = vmax.f32 %v500, %v501
    %v503 = vrot.slane %v502, 1
    %v504 = vmax.f32 %v502, %v503
    %v505 = vsub.f32 %v473, %v504
    %v506 = vmul.f32 %v505, 1.442695
    %v507 = vpow.pop %v506
    %v508 = vrot.slane %v507, 4
    %v509 = vadd.f32 %v507, %v508
    %v510 = vrot.slane %v509, 2
    %v511 = vadd.f32 %v509, %v510
    %v512 = vrot.slane %v511, 1
    %v513 = vadd.f32 %v511, %v512
    %v514 = vrcp.pop %v513
    %v515 = vmul.f32 %v507, %v514
    %v516 = vmul.f32 %v463, %v515
    %v517 = vsel %vm467, %v516, 0.0
    %v518 = vrot.slane %v517, 4
    %v519 = vadd.f32 %v517, %v518
    %v520 = vrot.slane %v519, 2
    %v521 = vadd.f32 %v519, %v520
    %v522 = vrot.slane %v521, 1
    %v523 = vadd.f32 %v521, %v522
    %vm524 = vcmask 1040384
    %v525 = vsel %vm524, %v498, %v523
    %v526 = vmax.f32 %v525, 0.0
    %v527 = vld [vmem:[#allocation10 + $0x30] sm:$0xff]
    %v528 = vld [vmem:[#allocation10 + $0x40] sm:$0xff]
    %v529 = vld [vmem:[#allocation10 + $0x50] sm:$0xff]
    %v530 = vld [vmem:[#allocation10 + $0x60] sm:$0xff]
    %v531 = vld [vmem:[#allocation10 + $0x70] sm:$0xff]
    %v532 = vld [vmem:[#allocation10 + $0x80] sm:$0xff]
    %v533 = vld [vmem:[#allocation10 + $0x90] sm:$0xff]
    %v534 = vld [vmem:[#allocation10 + $0xa0] sm:$0xff]
    %v535 = vld [vmem:[#allocation10 + $0xb0] ss:$0 sm:$0xff]
    %v537 = vsel %vm467, %v526, 0
    %539 = vmatpush.msra.mxu0 0.0
    %540 = vmatpush.msra.mxu0 0.0
    %541 = vmatpush.msra.mxu0 0.0
    %542 = vmatpush.msra.mxu0 0.0
    %543 = vmatpush.msra.mxu0 0.0
    %544 = vmatpush.msra.mxu0 0.0
    %545 = vmatpush.msra.mxu0 0.0
    %546 = vmatpush.msra.mxu0 0.0
    %547 = vmatpush.msra.mxu0 %v534
    %548 = vmatpush.msra.mxu0 %v533
    %549 = vmatpush.msra.mxu0 %v532
    %550 = vmatpush.msra.mxu0 %v531
    %551 = vmatpush.msra.mxu0 %v530
    %552 = vmatpush.msra.mxu0 %v529
    %553 = vmatpush.msra.mxu0 %v528
    %554 = vmatpush.msra.mxu0 %v527
    %555 = vmatmul.f32.gmra.mxu0 %v537
    %v556 = vpop.f32.mrf.mxu0
    %v557 = vadd.f32 %v535, %v556
    %558 = vdwg.mxu0
    %vm559 = vcmask 33792
    %560 = vst.msk [vmem:[#allocation13] sm:$0x3] %vm559, %v557
    // Predicated region
    $region14: #{tpu_custom_call.1} parent=1 // pred_check
      _
    $region15: #{tpu_custom_call.1} parent=1 // pred_check_branch
      %562 = sbr.rel (0) target = $region17
    $region16: #{tpu_custom_call.1} parent=1 // pred_region
      %564 = vsyncadd [#allocation12], 0
      %s566 = sshll.u32 [#allocation13], 4
      %s567 = int_to_ptr.vmem [resolvable:$true] %s566
      %s568 = sshll.u32 %s2, 4
      %s569 = int_to_ptr.hbm [resolvable:$true] %s568
      %571 = dma.vmem_to_hbm [thread:$0]  %s567, 32, %s569, [#allocation12]
    $region17: #{tpu_custom_call.1} parent=1 // pred_fallthru
      _
    // Predicated region
    $region18: #{tpu_custom_call.1} parent=1 // pred_check
      _
    $region19: #{tpu_custom_call.1} parent=1 // pred_check_branch
      %573 = sbr.rel (0) target = $region21
    $region20: #{tpu_custom_call.1} parent=1 // pred_region
      %575 = dma.done [#allocation12], 32
    $region21: #{tpu_custom_call.1} parent=1 // pred_fallthru
      _
    %576 = vsyncpa [#allocation11], 1
    %577 = vsyncpa [#allocation12], 1

</llo_original>
